<compile_context>
chip_gen: v7x
topology: tpu7x:2x2x1
jax: 0.10.0
libtpu: 0.0.40
codegen_flags: <defaults>
</compile_context>

<pallas_src>
import functools

import jax
import jax.numpy as jnp
from jax import lax
from jax.experimental import pallas as pl
from jax.experimental.pallas import tpu as pltpu


def _cdiv(a, b):
    return (a + b - 1) // b


def _round_up(v, m):
    return _cdiv(v, m) * m


def _vmem_limit_bytes(est_bytes):
    # Explicit scoped-VMEM request with headroom; kept conservative so the
    # same config also fits v7x's 64 MiB-per-TensorCore physical VMEM.
    return int(min(max(2 * est_bytes, 16 << 20), 48 << 20))


# ---------------------------------------------------------------------------
# Fused path (feat_p <= 2*hp): one kernel does X@W, A@XW, bias and classifier.
# Grid = (row tiles of A/z, column tiles of A). W / bias rows are resident.
# ---------------------------------------------------------------------------
def gcn_fused_kernel(a_ref, x_ref, w_ref, bg_ref, wc_ref, bc_ref,
                     y_ref, z_ref, acc_ref):
    """a:[TM,TK]bf16  x:[TK,FP]bf16  w:[FP,HP]bf16  bg/wc:[1,HP]f32
       bc:[1,1]f32 (SMEM)  y:[TM,1]f32  z:[TM,HP]f32  acc:[TM,HP]f32 (VMEM)."""
    k = pl.program_id(1)

    @pl.when(k == 0)
    def _():
        acc_ref[...] = jnp.zeros_like(acc_ref)

    # Recompute XW_k on the fly (bf16 staging keeps the A@XW dot bf16/bf16).
    xw_k = jnp.dot(x_ref[...], w_ref[...],
                   preferred_element_type=jnp.float32).astype(jnp.bfloat16)
    acc_ref[...] += jnp.dot(a_ref[...], xw_k,
                            preferred_element_type=jnp.float32)

    @pl.when(k == pl.num_programs(1) - 1)
    def _():
        z = acc_ref[...] + bg_ref[...]
        z_ref[...] = z.astype(z_ref.dtype)
        # Width-1 classifier as a VPU/XLU reduction (no MXU pass for 1 lane).
        y = jnp.sum(z * wc_ref[...], axis=-1, keepdims=True) + bc_ref[0, 0]
        y_ref[...] = y.astype(y_ref.dtype)


# ---------------------------------------------------------------------------
# Two-stage path (nfeat >> nhid): stage 1 stages XW, stage 2 aggregates.
# ---------------------------------------------------------------------------
def xw_kernel(x_ref, w_ref, xw_ref):
    xw_ref[...] = jnp.dot(
        x_ref[...], w_ref[...], preferred_element_type=jnp.float32
    ).astype(xw_ref.dtype)


def gcn_agg_kernel(a_ref, xw_ref, bg_ref, wc_ref, bc_ref,
                   y_ref, z_ref, acc_ref, *, tk, xw_resident):
    """One (row_tile, k_tile) step of Z = A_hat @ XW + b; classifier in the
    finalize.  When xw_resident, xw_ref holds the full (n_pad_c, hp) matrix
    in VMEM (fetched once) and is sliced per k; otherwise it is a streamed
    (tk, hp) tile."""
    k = pl.program_id(1)

    @pl.when(k == 0)
    def _():
        acc_ref[...] = jnp.zeros_like(acc_ref)

    if xw_resident:
        off = pl.multiple_of(k * tk, tk)
        xw = xw_ref[pl.ds(off, tk), :]
    else:
        xw = xw_ref[...]
    acc_ref[...] += jnp.dot(a_ref[...], xw, preferred_element_type=jnp.float32)

    @pl.when(k == pl.num_programs(1) - 1)
    def _():
        z = acc_ref[...] + bg_ref[...]
        z_ref[...] = z.astype(z_ref.dtype)
        y = jnp.sum(z * wc_ref[...], axis=-1, keepdims=True) + bc_ref[0, 0]
        y_ref[...] = y.astype(y_ref.dtype)


def gcn_adv_forward(a_hat, x, w_gcn, b_gcn, w_cls, b_cls, *, tm=512, tk=512):
    """Fused GCN_adv forward. Returns (y [N,1], z [N,nhid]) in float32."""
    n, feat = x.shape
    hid = w_gcn.shape[1]
    f32, bf16 = jnp.float32, jnp.bfloat16

    hp = _round_up(hid, 128)        # lane-dense hidden width
    feat_p = _round_up(feat, 128)   # lane-dense feature width (full-K MXU)
    n128 = _round_up(n, 128)

    # --- tile selection: 128-aligned, balanced, minimal padding -------------
    tm = min(tm, n128)
    tk = min(tk, n128)
    n_row_tiles = _cdiv(n128, tm)
    n_col_tiles = _cdiv(n128, tk)
    tm = _round_up(_cdiv(n128, n_row_tiles), 128)
    tk = _round_up(_cdiv(n128, n_col_tiles), 128)
    # Keep >= 2 row tiles (v7x megacore) when it costs no extra padding.
    if n_row_tiles == 1 and n128 >= 256 and (n128 // 2) % 128 == 0:
        tm = n128 // 2

    # Rows / columns of A padded independently to their own tile sizes.
    n_pad_r = _round_up(n, tm)
    n_pad_c = _round_up(n, tk)
    grid = (n_pad_r // tm, n_pad_c // tk)

    # --- pad + cast inputs (zero padding keeps the math exact) --------------
    a_p = jnp.zeros((n_pad_r, n_pad_c), bf16).at[:n, :n].set(a_hat.astype(bf16))
    x_p = jnp.zeros((n_pad_c, feat_p), bf16).at[:n, :feat].set(x.astype(bf16))
    wg_p = jnp.zeros((feat_p, hp), bf16).at[:feat, :hid].set(w_gcn.astype(bf16))
    bg_p = jnp.zeros((1, hp), f32).at[0, :hid].set(b_gcn.astype(f32))
    wc_p = jnp.zeros((1, hp), f32).at[0, :hid].set(w_cls.reshape(-1).astype(f32))
    bc_p = b_cls.reshape(1, 1).astype(f32)

    out_shape = (jax.ShapeDtypeStruct((n_pad_r, 1), f32),
                 jax.ShapeDtypeStruct((n_pad_r, hp), f32))
    out_specs = (pl.BlockSpec((tm, 1), lambda i, k: (i, 0)),
                 pl.BlockSpec((tm, hp), lambda i, k: (i, 0)))
    scratch = [pltpu.VMEM((tm, hp), f32)]
    dims = ("parallel", "arbitrary")

    use_fused = feat_p <= 2 * hp
    if use_fused:
        est = (2 * tm * tk * 2 + 2 * tk * feat_p * 2 + 2 * feat_p * hp * 2
               + 2 * tm * hp * 4 + 2 * tm * 4 + tm * hp * 4 + 4 * hp * 4)
        cost = pl.CostEstimate(
            flops=(2 * n_pad_r * n_pad_c * hp
                   + 2 * grid[0] * n_pad_c * feat_p * hp
                   + 2 * n_pad_r * hp),
            transcendentals=0,
            bytes_accessed=(n_pad_r * n_pad_c * 2
                            + grid[0] * n_pad_c * feat_p * 2
                            + feat_p * hp * 2
                            + n_pad_r * hp * 4 + n_pad_r * 4),
        )
        y, z = pl.pallas_call(
            gcn_fused_kernel,
            out_shape=out_shape,
            grid=grid,
            in_specs=[
                pl.BlockSpec((tm, tk), lambda i, k: (i, k)),        # A tile
                pl.BlockSpec((tk, feat_p), lambda i, k: (k, 0)),    # X tile
                pl.BlockSpec((feat_p, hp), lambda i, k: (0, 0)),    # W resident
                pl.BlockSpec((1, hp), lambda i, k: (0, 0)),         # b_gcn
                pl.BlockSpec((1, hp), lambda i, k: (0, 0)),         # w_cls row
                pl.BlockSpec(memory_space=pltpu.MemorySpace.SMEM),  # b_cls
            ],
            out_specs=out_specs,
            scratch_shapes=scratch,
            compiler_params=pltpu.CompilerParams(
                dimension_semantics=dims,
                vmem_limit_bytes=_vmem_limit_bytes(est)),
            cost_estimate=cost,
        )(a_p, x_p, wg_p, bg_p, wc_p, bc_p)
    else:
        # ---- stage 1: XW = X @ W (row-tiled by tk so rows match stage 2) ---
        est1 = 2 * tk * feat_p * 2 + 2 * feat_p * hp * 2 + 2 * tk * hp * 2
        xw = pl.pallas_call(
            xw_kernel,
            out_shape=jax.ShapeDtypeStruct((n_pad_c, hp), bf16),
            grid=(n_pad_c // tk,),
            in_specs=[
                pl.BlockSpec((tk, feat_p), lambda i: (i, 0)),
                pl.BlockSpec((feat_p, hp), lambda i: (0, 0)),
            ],
            out_specs=pl.BlockSpec((tk, hp), lambda i: (i, 0)),
            compiler_params=pltpu.CompilerParams(
                dimension_semantics=("parallel",),
                vmem_limit_bytes=_vmem_limit_bytes(est1)),
        )(x_p, wg_p)

        # ---- stage 2: Z = A_hat @ XW + b_gcn ; y = classifier --------------
        xw_bytes = n_pad_c * hp * 2
        xw_resident = 2 * xw_bytes <= (12 << 20)   # double-buffer footprint
        if xw_resident:
            xw_spec = pl.BlockSpec((n_pad_c, hp), lambda i, k: (0, 0))
            xw_stream_bytes = xw_bytes
        else:
            xw_spec = pl.BlockSpec((tk, hp), lambda i, k: (k, 0))
            xw_stream_bytes = grid[0] * n_pad_c * hp * 2

        est2 = (2 * tm * tk * 2
                + (2 * xw_bytes if xw_resident else 2 * tk * hp * 2)
                + 2 * tm * hp * 4 + 2 * tm * 4 + tm * hp * 4 + 4 * hp * 4)
        cost = pl.CostEstimate(
            flops=2 * n_pad_r * n_pad_c * hp + 2 * n_pad_r * hp,
            transcendentals=0,
            bytes_accessed=(n_pad_r * n_pad_c * 2 + xw_stream_bytes
                            + n_pad_r * hp * 4 + n_pad_r * 4),
        )
        kernel = functools.partial(gcn_agg_kernel, tk=tk,
                                   xw_resident=xw_resident)
        y, z = pl.pallas_call(
            kernel,
            out_shape=out_shape,
            grid=grid,
            in_specs=[
                pl.BlockSpec((tm, tk), lambda i, k: (i, k)),        # A tile
                xw_spec,                                            # XW
                pl.BlockSpec((1, hp), lambda i, k: (0, 0)),         # b_gcn
                pl.BlockSpec((1, hp), lambda i, k: (0, 0)),         # w_cls row
                pl.BlockSpec(memory_space=pltpu.MemorySpace.SMEM),  # b_cls
            ],
            out_specs=out_specs,
            scratch_shapes=scratch,
            compiler_params=pltpu.CompilerParams(
                dimension_semantics=dims,
                vmem_limit_bytes=_vmem_limit_bytes(est2)),
            cost_estimate=cost,
        )(a_p, xw, bg_p, wc_p, bc_p)

    return y[:n], z[:n, :hid]


def build_normalized_adjacency(edge_index, num_nodes):
    """Dense A_hat = D^{-1/2} (A + I) D^{-1/2}, PyG gcn_norm semantics.

    Uses add_remaining_self_loops: a self-loop is only added for nodes that do
    not already have one (no diagonal double-counting)."""
    src = edge_index[0]
    dst = edge_index[1]
    a = jnp.zeros((num_nodes, num_nodes), jnp.float32).at[dst, src].add(1.0)
    idx = jnp.arange(num_nodes)
    diag = a[idx, idx]
    a = a.at[idx, idx].set(jnp.where(diag > 0, diag, 1.0))
    deg = a.sum(axis=1)
    dinv = jnp.where(deg > 0, 1.0 / jnp.sqrt(deg), 0.0)
    return dinv[:, None] * a * dinv[None, :]


def _make_demo_graph(key, n, num_rand_edges):
    """Deterministic random undirected edge list (2, 2E), no self loops."""
    heads = jax.random.randint(key, (num_rand_edges,), 0, n, dtype=jnp.int32)
    tails = (heads + 1 + jax.random.randint(
        jax.random.fold_in(key, 1), (num_rand_edges,), 0, n - 1,
        dtype=jnp.int32)) % n
    return jnp.stack([jnp.concatenate([heads, tails]),
                      jnp.concatenate([tails, heads])])


def _reference(a_hat, x, w_gcn, b_gcn, w_cls, b_cls):
    """Reference with the kernel's bf16 input quantization, f32 accumulation."""
    def _bf(t):
        return t.astype(jnp.bfloat16).astype(jnp.float32)
    hi = lax.Precision.HIGHEST
    xw = _bf(jnp.dot(_bf(x), _bf(w_gcn), precision=hi))
    z = jnp.dot(_bf(a_hat), xw, precision=hi) + b_gcn[None, :]
    y = jnp.dot(z, w_cls, precision=hi) + b_cls[None, :]
    return y, z


if __name__ == "__main__":
    key = jax.random.PRNGKey(0)

    def run_case(case_key, n, nfeat, nhid, num_edges):
        kx, ke, kwg, kwc = jax.random.split(case_key, 4)
        x = jax.random.normal(kx, (n, nfeat), dtype=jnp.float32)
        edge_index = _make_demo_graph(ke, n, num_edges)

        # Deterministic glorot-ish synthetic parameters.
        w_gcn = jax.random.normal(kwg, (nfeat, nhid), dtype=jnp.float32) * (
            (6.0 / (nfeat + nhid)) ** 0.5)
        b_gcn = jnp.zeros((nhid,), jnp.float32)
        w_cls = jax.random.normal(kwc, (nhid, 1), dtype=jnp.float32) * (
            (6.0 / (nhid + 1)) ** 0.5)
        b_cls = jnp.zeros((1,), jnp.float32)

        a_hat = build_normalized_adjacency(edge_index, n)

        y, z = gcn_adv_forward(a_hat, x, w_gcn, b_gcn, w_cls, b_cls)
        jax.block_until_ready((y, z))
        assert y.shape == (n, 1) and z.shape == (n, nhid)

        # Check against the bf16-matched reference.
        y_ref, z_ref = _reference(a_hat, x, w_gcn, b_gcn, w_cls, b_cls)
        assert jnp.allclose(z, z_ref, atol=1e-2, rtol=1e-2)
        assert jnp.allclose(y, y_ref, atol=1e-2, rtol=1e-2)

        # Looser sanity check against pure-f32 math.
        z_f32 = a_hat @ (x @ w_gcn) + b_gcn[None, :]
        y_f32 = z_f32 @ w_cls + b_cls[None, :]
        assert jnp.allclose(z, z_f32, atol=5e-2, rtol=5e-2)
        assert jnp.allclose(y, y_f32, atol=5e-2, rtol=5e-2)

    # Case 1 (module-consistent small shapes): exercises the fused
    # single-launch fast path (nfeat comparable to nhid).
    run_case(jax.random.fold_in(key, 0), n=512, nfeat=64, nhid=32,
             num_edges=1024)
    # Case 2 (nfeat >> nhid): exercises the two-stage path with VMEM-resident
    # XW and a multi-tile k axis.
    run_case(jax.random.fold_in(key, 1), n=640, nfeat=384, nhid=32,
             num_edges=1536)

    print("KERNEL_OK")
</pallas_src>

<mosaic_0001>
module attributes {stable_mosaic.version = 11 : i64} {
  func.func @gcn_fused_kernel(%arg0: i32, %arg1: i32, %arg2: memref<256x512xbf16, #tpu.memory_space<vmem>>, %arg3: memref<512x128xbf16, #tpu.memory_space<vmem>>, %arg4: memref<128x128xbf16, #tpu.memory_space<vmem>>, %arg5: memref<1x128xf32, #tpu.memory_space<vmem>>, %arg6: memref<1x128xf32, #tpu.memory_space<vmem>>, %arg7: memref<1x1xf32, #tpu.memory_space<smem>>, %arg8: memref<256x1xf32, #tpu.memory_space<vmem>>, %arg9: memref<256x128xf32, #tpu.memory_space<vmem>>, %arg10: memref<256x128xf32, #tpu.memory_space<vmem>>) attributes {dimension_semantics = [#tpu.dimension_semantics<parallel>, #tpu.dimension_semantics<arbitrary>], iteration_bounds = array<i64: 2, 1>, scalar_prefetch = 0 : i64, scratch_operands = 1 : i64, tpu.core_type = #tpu.core_type<tc>, window_params = [{transform_indices = @transform_0, window_bounds = array<i64: 256, 512>}, {transform_indices = @transform_1, window_bounds = array<i64: 512, 128>}, {pipeline_mode = #tpu.pipeline_mode<synchronous>, transform_indices = @transform_2, window_bounds = array<i64: 128, 128>}, {pipeline_mode = #tpu.pipeline_mode<synchronous>, transform_indices = @transform_3, window_bounds = array<i64: 1, 128>}, {pipeline_mode = #tpu.pipeline_mode<synchronous>, transform_indices = @transform_4, window_bounds = array<i64: 1, 128>}, {transform_indices = @transform_5, window_bounds = array<i64: 1, 1>}, {transform_indices = @transform_6, window_bounds = array<i64: 256, 1>}, {transform_indices = @transform_7, window_bounds = array<i64: 256, 128>}]} {
    %c0_i32 = arith.constant 0 : i32
    %0 = arith.cmpi eq, %arg1, %c0_i32 : i32
    %1 = arith.extui %0 : i1 to i32
    %c0_i32_0 = arith.constant 0 : i32
    %2 = arith.cmpi ne, %1, %c0_i32_0 : i32
    scf.if %2 {
      %cst_13 = arith.constant 0.000000e+00 : f32
      %15 = vector.broadcast %cst_13 : f32 to vector<256x128xf32>
      %c0_14 = arith.constant 0 : index
      %c0_15 = arith.constant 0 : index
      %16 = vector.load %arg10[%c0_14, %c0_15] : memref<256x128xf32, #tpu.memory_space<vmem>>, vector<256x128xf32>
      tpu.vector_store %arg10[%c0_14, %c0_15], %15 {strides = array<i32>} : memref<256x128xf32, #tpu.memory_space<vmem>>, vector<256x128xf32>,
    } else {
    }
    %c0 = arith.constant 0 : index
    %c0_1 = arith.constant 0 : index
    %3 = vector.load %arg3[%c0, %c0_1] : memref<512x128xbf16, #tpu.memory_space<vmem>>, vector<512x128xbf16>
    %c0_2 = arith.constant 0 : index
    %c0_3 = arith.constant 0 : index
    %4 = vector.load %arg4[%c0_2, %c0_3] : memref<128x128xbf16, #tpu.memory_space<vmem>>, vector<128x128xbf16>
    %cst = arith.constant dense<0.000000e+00> : vector<512x128xf32>
    %5 = tpu.matmul %3, %4, %cst {dimension_numbers = #tpu.dot_dimension_numbers<[1], [0], [0], [1], [0, 0, 1, 1], [], []>} : vector<512x128xbf16>, vector<128x128xbf16>, vector<512x128xf32> -> vector<512x128xf32>
    %6 = arith.truncf %5 : vector<512x128xf32> to vector<512x128xbf16>
    %c0_4 = arith.constant 0 : index
    %c0_5 = arith.constant 0 : index
    %7 = vector.load %arg10[%c0_4, %c0_5] : memref<256x128xf32, #tpu.memory_space<vmem>>, vector<256x128xf32>
    %c0_6 = arith.constant 0 : index
    %c0_7 = arith.constant 0 : index
    %8 = vector.load %arg2[%c0_6, %c0_7] : memref<256x512xbf16, #tpu.memory_space<vmem>>, vector<256x512xbf16>
    %cst_8 = arith.constant dense<0.000000e+00> : vector<256x128xf32>
    %9 = tpu.matmul %8, %6, %cst_8 {dimension_numbers = #tpu.dot_dimension_numbers<[1], [0], [0], [1], [0, 0, 1, 1], [], []>} : vector<256x512xbf16>, vector<512x128xbf16>, vector<256x128xf32> -> vector<256x128xf32>
    %10 = arith.addf %7, %9 : vector<256x128xf32>
    %c0_9 = arith.constant 0 : index
    %c0_10 = arith.constant 0 : index
    %11 = vector.load %arg10[%c0_9, %c0_10] : memref<256x128xf32, #tpu.memory_space<vmem>>, vector<256x128xf32>
    tpu.vector_store %arg10[%c0_9, %c0_10], %10 {strides = array<i32>} : memref<256x128xf32, #tpu.memory_space<vmem>>, vector<256x128xf32>,
    %c0_i32_11 = arith.constant 0 : i32
    %12 = arith.cmpi eq, %arg1, %c0_i32_11 : i32
    %13 = arith.extui %12 : i1 to i32
    %c0_i32_12 = arith.constant 0 : i32
    %14 = arith.cmpi ne, %13, %c0_i32_12 : i32
    scf.if %14 {
      %c0_13 = arith.constant 0 : index
      %c0_14 = arith.constant 0 : index
      %15 = vector.load %arg10[%c0_13, %c0_14] : memref<256x128xf32, #tpu.memory_space<vmem>>, vector<256x128xf32>
      %c0_15 = arith.constant 0 : index
      %c0_16 = arith.constant 0 : index
      %16 = vector.load %arg5[%c0_15, %c0_16] : memref<1x128xf32, #tpu.memory_space<vmem>>, vector<1x128xf32>
      %17 = vector.broadcast %16 : vector<1x128xf32> to vector<256x128xf32>
      %18 = arith.addf %15, %17 : vector<256x128xf32>
      %c0_17 = arith.constant 0 : index
      %c0_18 = arith.constant 0 : index
      %19 = vector.load %arg9[%c0_17, %c0_18] : memref<256x128xf32, #tpu.memory_space<vmem>>, vector<256x128xf32>
      tpu.vector_store %arg9[%c0_17, %c0_18], %18 {strides = array<i32>} : memref<256x128xf32, #tpu.memory_space<vmem>>, vector<256x128xf32>,
      %c0_19 = arith.constant 0 : index
      %c0_20 = arith.constant 0 : index
      %20 = vector.load %arg6[%c0_19, %c0_20] : memref<1x128xf32, #tpu.memory_space<vmem>>, vector<1x128xf32>
      %21 = vector.broadcast %20 : vector<1x128xf32> to vector<256x128xf32>
      %22 = arith.mulf %18, %21 : vector<256x128xf32>
      %cst_21 = arith.constant dense<0.000000e+00> : vector<256xf32>
      %23 = vector.multi_reduction <add>, %22, %cst_21 [1] : vector<256x128xf32> to vector<256xf32>
      %24 = vector.shape_cast %23 : vector<256xf32> to vector<256x1xf32>
      %c0_22 = arith.constant 0 : index
      %c0_23 = arith.constant 0 : index
      %25 = memref.load %arg7[%c0_22, %c0_23] : memref<1x1xf32, #tpu.memory_space<smem>>
      %26 = vector.broadcast %25 : f32 to vector<256x1xf32>
      %27 = arith.addf %24, %26 : vector<256x1xf32>
      %c0_24 = arith.constant 0 : index
      %c0_25 = arith.constant 0 : index
      %28 = vector.load %arg8[%c0_24, %c0_25] : memref<256x1xf32, #tpu.memory_space<vmem>>, vector<256x1xf32>
      tpu.vector_store %arg8[%c0_24, %c0_25], %27 {strides = array<i32>} : memref<256x1xf32, #tpu.memory_space<vmem>>, vector<256x1xf32>,
    } else {
    }
    return
  }
  func.func @transform_0(%arg0: i32, %arg1: i32) -> (i32, i32) {
    %c0_i32 = arith.constant 0 : i32
    return %arg0, %arg1 : i32, i32
  }
  func.func @transform_1(%arg0: i32, %arg1: i32) -> (i32, i32) {
    %c0_i32 = arith.constant 0 : i32
    %c0_i32_0 = arith.constant 0 : i32
    return %arg1, %c0_i32 : i32, i32
  }
  func.func @transform_2(%arg0: i32, %arg1: i32) -> (i32, i32) {
    %c0_i32 = arith.constant 0 : i32
    %c0_i32_0 = arith.constant 0 : i32
    %c0_i32_1 = arith.constant 0 : i32
    return %c0_i32, %c0_i32_0 : i32, i32
  }
  func.func @transform_3(%arg0: i32, %arg1: i32) -> (i32, i32) {
    %c0_i32 = arith.constant 0 : i32
    %c0_i32_0 = arith.constant 0 : i32
    %c0_i32_1 = arith.constant 0 : i32
    return %c0_i32, %c0_i32_0 : i32, i32
  }
  func.func @transform_4(%arg0: i32, %arg1: i32) -> (i32, i32) {
    %c0_i32 = arith.constant 0 : i32
    %c0_i32_0 = arith.constant 0 : i32
    %c0_i32_1 = arith.constant 0 : i32
    return %c0_i32, %c0_i32_0 : i32, i32
  }
  func.func @transform_5(%arg0: i32, %arg1: i32) -> (i32, i32) {
    %c0_i32 = arith.constant 0 : i32
    %c0_i32_0 = arith.constant 0 : i32
    %c0_i32_1 = arith.constant 0 : i32
    return %c0_i32, %c0_i32_0 : i32, i32
  }
  func.func @transform_6(%arg0: i32, %arg1: i32) -> (i32, i32) {
    %c0_i32 = arith.constant 0 : i32
    %c0_i32_0 = arith.constant 0 : i32
    return %arg0, %c0_i32 : i32, i32
  }
  func.func @transform_7(%arg0: i32, %arg1: i32) -> (i32, i32) {
    %c0_i32 = arith.constant 0 : i32
    %c0_i32_0 = arith.constant 0 : i32
    return %arg0, %c0_i32 : i32, i32
  }
}

</mosaic_0001>

<llo_original>
// kernel: tpu_custom_call.1
$region0: #{tpu_custom_call.1}
  #allocation0 [shape = 'u32[]', space=smem, size = 0x4, offset = 0x4, fixed_abs, tag = 'smem constant byte address 0x4 - core index']
  #allocation1 [shape = 'u32[144,128]{1,0:T(1,128)}', space=vmem, size = 0x12000, scoped, tag = 'internal scratch']
  #allocation2 [shape = 'f32[256,128]{1,0:T(8,128)}', space=vmem, size = 0x20000, scoped, tag = 'scratch operand']
  #allocation3 [shape = 'f32[1,1]{1,0:T(1,128)S(6)}', space=smem, size = 0x200, scoped, tag = 'scoped memory for tpu_custom_call.1']
  %s0 = inlined_call_operand.hbm [shape: bf16[512,512], index: 0, kind: input, shape index: {}]
  %s1 = inlined_call_operand.hbm [shape: bf16[512,128], index: 1, kind: input, shape index: {}]
  %s2 = inlined_call_operand.hbm [shape: bf16[128,128], index: 2, kind: input, shape index: {}]
  %s3 = inlined_call_operand.vmem [shape: f32[1,128], index: 3, kind: input, shape index: {}]
  %s4 = inlined_call_operand.vmem [shape: f32[1,128], index: 4, kind: input, shape index: {}]
  %s5 = inlined_call_operand.<no memory space> [shape: f32[1,1], index: 5, kind: input, shape index: {}]
  %s6 = inlined_call_operand.vmem [shape: f32[512,1], index: 6, kind: output, shape index: {0}]
  %s7 = inlined_call_operand.hbm [shape: f32[512,128], index: 7, kind: output, shape index: {1}]
  %8 = xla_tuple %s6, %s7
  %s9 = sld [smem:[#allocation0]]
  $region85: #{tpu_custom_call.1} parent=0
    _
  %s11 = ssub.s32 1, %s9
  %s12 = scalar_select 0, %s11, %s9
  %13 = sst [smem:[#allocation3]] %s5
  $region1: #{tpu_custom_call.1} parent=0
    #allocation4 [shape = 'u8[524288]{0}', space=vmem, size = 0x80000, scoped, tag = 'input window, operand 0']
    #allocation5 [shape = 's32[2]{0}', space=sflag, size = 0x8, scoped, tag = 'scoped memory for tpu_custom_call.1']
    #allocation6 [shape = 's32[2]{0}', space=sflag, size = 0x8, scoped, tag = 'scoped memory for tpu_custom_call.1']
    #allocation7 [shape = 'u8[131072]{0}', space=vmem, size = 0x20000, scoped, tag = 'input window, operand 1, single buffered']
    #allocation8 [shape = 's32[1]{0}', space=sflag, size = 0x4, scoped, tag = 'scoped memory for tpu_custom_call.1']
    #allocation9 [shape = 'u8[32768]{0}', space=vmem, size = 0x8000, scoped, tag = 'input window, operand 2, single buffered']
    #allocation10 [shape = 'u8[262144]{0}', space=vmem, size = 0x40000, scoped, tag = 'output window, operand 1']
    %14 = vsyncpa [#allocation5], 0
    %s15 = scalar_lea.sflag [#allocation5], 1
    %16 = vsyncpa %s15, 0
    %17 = vsyncpa [#allocation8], 0
    %18 = vsyncpa [#allocation6], 0
    %s19 = scalar_lea.sflag [#allocation6], 1
    %20 = vsyncpa %s19, 0
    loop: start=0, step=1, limit=4
    $region2: #{tpu_custom_call.1} parent=1 // loop_pre_header
      _
    $region3: #{tpu_custom_call.1} parent=1 // loop_header
      %s22 = sphi 0, %s26
      %p23 = scmp.ge.s32.totalorder %s22, 4
      %s29 = sphi 0, %s41
      %s30 = sphi 0, %s37
      %s31 = sphi 0, %s29
      %s32 = sphi 0, %s30
      %s33 = sphi 0, %s31
      %s34 = sphi 0, %s32
      %s46 = sphi 0, %s48
      %s49 = sphi 0, %s46
      %s50 = sphi 0, %s49
      %s66 = sphi 0, %s50
      %s72 = sphi 0, %s74
      %s75 = sphi 0, %s72
      %s76 = sphi 0, %s75
      %s92 = sphi 0, %s76
      %s96 = sphi 0, %s96
      %s98 = sphi 0, %s96
      %s99 = sphi 0, %s98
      %s113 = sphi 0, %s99
      %s117 = sphi 0, %s117
      %s119 = sphi 0, %s117
      %s120 = sphi 0, %s119
      %s134 = sphi 0, %s120
      %s138 = sphi 0, %s138
      %s140 = sphi 0, %s138
      %s141 = sphi 0, %s140
      %s155 = sphi 0, %s141
      %s159 = sphi 0, %s159
      %s161 = sphi 0, %s159
      %s162 = sphi 0, %s161
      %s176 = sphi 0, %s162
      %s182 = sphi 0, %s184
      %s185 = sphi 0, %s182
      %s186 = sphi 0, %s185
      %s202 = sphi 0, %s186
      %s208 = sphi 0, %s210
      %s211 = sphi 0, %s208
      %s212 = sphi 0, %s211
      %s228 = sphi 0, %s212
    $region4: #{tpu_custom_call.1} parent=1 // loop_header_branch
      %25 = sbr.rel (%p23) target = $region8
    $region5: #{tpu_custom_call.1} parent=1 // loop_body
      %s27 = ssub.s32 %s22, 1
      %s28 = ssub.s32 %s22, 2
      %s35 = sadd.s32 1, %s30
      %p36 = scmp.ge.s32.totalorder %s35, 1
      %s37 = scalar_select %p36, 0, %s35
      %s38 = sadd.s32 1, %s29
      %s39 = scalar_select %p36, %s38, %s29
      %p40 = scmp.ge.s32.totalorder %s39, 2
      %s41 = scalar_select %p40, 0, %s39
      %s42 = ssub.s32 %s29, %s41
      %s43 = ssub.s32 %s30, %s37
      %s44 = sor.u32 %s42, %s43
      %p45 = scmp.eq.s32.totalorder %s44, 0
      %s47 = sadd.s32 %s46, 1
      %s48 = scalar_select %p45, %s46, %s47
      %p51 = pneg %p45
      %p52 = scmp.eq.s32.totalorder %s22, 1
      %p53 = por %p51, %p52
      %p54 = scmp.ne.s32.totalorder %s46, %s49
      %p55 = scmp.eq.s32.totalorder %s22, 0
      %p56 = por %p54, %p55
      %p57 = scmp.ne.s32.totalorder %s46, %s49
      %p58 = scmp.eq.s32.totalorder %s27, 1
      %p59 = por %p57, %p58
      %p60 = scmp.ne.s32.totalorder %s49, %s50
      %p61 = scmp.eq.s32.totalorder %s27, 0
      %p62 = por %p60, %p61
      %p63 = scmp.ne.s32.totalorder %s49, %s50
      %p64 = scmp.eq.s32.totalorder %s28, 1
      %p65 = por %p63, %p64
      %p67 = scmp.ne.s32.totalorder %s50, %s66
      %p68 = scmp.eq.s32.totalorder %s28, 0
      %p69 = por %p67, %p68
      %s70 = ssub.s32 %s30, %s37
      %p71 = scmp.eq.s32.totalorder %s70, 0
      %s73 = sadd.s32 %s72, 1
      %s74 = scalar_select %p71, %s72, %s73
      %p77 = pneg %p71
      %p78 = scmp.eq.s32.totalorder %s22, 1
      %p79 = por %p77, %p78
      %p80 = scmp.ne.s32.totalorder %s72, %s75
      %p81 = scmp.eq.s32.totalorder %s22, 0
      %p82 = por %p80, %p81
      %p83 = scmp.ne.s32.totalorder %s72, %s75
      %p84 = scmp.eq.s32.totalorder %s27, 1
      %p85 = por %p83, %p84
      %p86 = scmp.ne.s32.totalorder %s75, %s76
      %p87 = scmp.eq.s32.totalorder %s27, 0
      %p88 = por %p86, %p87
      %p89 = scmp.ne.s32.totalorder %s75, %s76
      %p90 = scmp.eq.s32.totalorder %s28, 1
      %p91 = por %p89, %p90
      %p93 = scmp.ne.s32.totalorder %s76, %s92
      %p94 = scmp.eq.s32.totalorder %s28, 0
      %p95 = por %p93, %p94
      %s97 = sadd.s32 %s96, 1
      %p100 = scmp.eq.s32.totalorder %s22, 1
      %p101 = scmp.ne.s32.totalorder %s96, %s98
      %p102 = scmp.eq.s32.totalorder %s22, 0
      %p103 = por %p101, %p102
      %p104 = scmp.ne.s32.totalorder %s96, %s98
      %p105 = scmp.eq.s32.totalorder %s27, 1
      %p106 = por %p104, %p105
      %p107 = scmp.ne.s32.totalorder %s98, %s99
      %p108 = scmp.eq.s32.totalorder %s27, 0
      %p109 = por %p107, %p108
      %p110 = scmp.ne.s32.totalorder %s98, %s99
      %p111 = scmp.eq.s32.totalorder %s28, 1
      %p112 = por %p110, %p111
      %p114 = scmp.ne.s32.totalorder %s99, %s113
      %p115 = scmp.eq.s32.totalorder %s28, 0
      %p116 = por %p114, %p115
      %s118 = sadd.s32 %s117, 1
      %p121 = scmp.eq.s32.totalorder %s22, 1
      %p122 = scmp.ne.s32.totalorder %s117, %s119
      %p123 = scmp.eq.s32.totalorder %s22, 0
      %p124 = por %p122, %p123
      %p125 = scmp.ne.s32.totalorder %s117, %s119
      %p126 = scmp.eq.s32.totalorder %s27, 1
      %p127 = por %p125, %p126
      %p128 = scmp.ne.s32.totalorder %s119, %s120
      %p129 = scmp.eq.s32.totalorder %s27, 0
      %p130 = por %p128, %p129
      %p131 = scmp.ne.s32.totalorder %s119, %s120
      %p132 = scmp.eq.s32.totalorder %s28, 1
      %p133 = por %p131, %p132
      %p135 = scmp.ne.s32.totalorder %s120, %s134
      %p136 = scmp.eq.s32.totalorder %s28, 0
      %p137 = por %p135, %p136
      %s139 = sadd.s32 %s138, 1
      %p142 = scmp.eq.s32.totalorder %s22, 1
      %p143 = scmp.ne.s32.totalorder %s138, %s140
      %p144 = scmp.eq.s32.totalorder %s22, 0
      %p145 = por %p143, %p144
      %p146 = scmp.ne.s32.totalorder %s138, %s140
      %p147 = scmp.eq.s32.totalorder %s27, 1
      %p148 = por %p146, %p147
      %p149 = scmp.ne.s32.totalorder %s140, %s141
      %p150 = scmp.eq.s32.totalorder %s27, 0
      %p151 = por %p149, %p150
      %p152 = scmp.ne.s32.totalorder %s140, %s141
      %p153 = scmp.eq.s32.totalorder %s28, 1
      %p154 = por %p152, %p153
      %p156 = scmp.ne.s32.totalorder %s141, %s155
      %p157 = scmp.eq.s32.totalorder %s28, 0
      %p158 = por %p156, %p157
      %s160 = sadd.s32 %s159, 1
      %p163 = scmp.eq.s32.totalorder %s22, 1
      %p164 = scmp.ne.s32.totalorder %s159, %s161
      %p165 = scmp.eq.s32.totalorder %s22, 0
      %p166 = por %p164, %p165
      %p167 = scmp.ne.s32.totalorder %s159, %s161
      %p168 = scmp.eq.s32.totalorder %s27, 1
      %p169 = por %p167, %p168
      %p170 = scmp.ne.s32.totalorder %s161, %s162
      %p171 = scmp.eq.s32.totalorder %s27, 0
      %p172 = por %p170, %p171
      %p173 = scmp.ne.s32.totalorder %s161, %s162
      %p174 = scmp.eq.s32.totalorder %s28, 1
      %p175 = por %p173, %p174
      %p177 = scmp.ne.s32.totalorder %s162, %s176
      %p178 = scmp.eq.s32.totalorder %s28, 0
      %p179 = por %p177, %p178
      %s180 = ssub.s32 %s29, %s41
      %p181 = scmp.eq.s32.totalorder %s180, 0
      %s183 = sadd.s32 %s182, 1
      %s184 = scalar_select %p181, %s182, %s183
      %p187 = pneg %p181
      %p188 = scmp.eq.s32.totalorder %s22, 1
      %p189 = por %p187, %p188
      %p190 = scmp.ne.s32.totalorder %s182, %s185
      %p191 = scmp.eq.s32.totalorder %s22, 0
      %p192 = por %p190, %p191
      %p193 = scmp.ne.s32.totalorder %s182, %s185
      %p194 = scmp.eq.s32.totalorder %s27, 1
      %p195 = por %p193, %p194
      %p196 = scmp.ne.s32.totalorder %s185, %s186
      %p197 = scmp.eq.s32.totalorder %s27, 0
      %p198 = por %p196, %p197
      %p199 = scmp.ne.s32.totalorder %s185, %s186
      %p200 = scmp.eq.s32.totalorder %s28, 1
      %p201 = por %p199, %p200
      %p203 = scmp.ne.s32.totalorder %s186, %s202
      %p204 = scmp.eq.s32.totalorder %s28, 0
      %p205 = por %p203, %p204
      %s206 = ssub.s32 %s29, %s41
      %p207 = scmp.eq.s32.totalorder %s206, 0
      %s209 = sadd.s32 %s208, 1
      %s210 = scalar_select %p207, %s208, %s209
      %p213 = pneg %p207
      %p214 = scmp.eq.s32.totalorder %s22, 1
      %p215 = por %p213, %p214
      %p216 = scmp.ne.s32.totalorder %s208, %s211
      %p217 = scmp.eq.s32.totalorder %s22, 0
      %p218 = por %p216, %p217
      %p219 = scmp.ne.s32.totalorder %s208, %s211
      %p220 = scmp.eq.s32.totalorder %s27, 1
      %p221 = por %p219, %p220
      %p222 = scmp.ne.s32.totalorder %s211, %s212
      %p223 = scmp.eq.s32.totalorder %s27, 0
      %p224 = por %p222, %p223
      %p225 = scmp.ne.s32.totalorder %s211, %s212
      %p226 = scmp.eq.s32.totalorder %s28, 1
      %p227 = por %p225, %p226
      %p229 = scmp.ne.s32.totalorder %s212, %s228
      %p230 = scmp.eq.s32.totalorder %s28, 0
      %p231 = por %p229, %p230
      %p232 = scmp.le.s32.totalorder 1, %s22
      %p233 = scmp.lt.s32.totalorder %s22, 3
      %p234 = pnand %p232, %p233
      %p235 = pneg %p234
      // Predicated region
      $region9: #{tpu_custom_call.1} parent=5 // pred_check
        _
      $region10: #{tpu_custom_call.1} parent=5 // pred_check_branch
        %237 = sbr.rel (%p234) target = $region12
      $region11: #{tpu_custom_call.1} parent=5 // pred_region
        %s238 = ssub.s32 %s22, 1
        // Predicated region
        $region13: #{tpu_custom_call.1} parent=11 // pred_check
          %p239 = pneg %p88
        $region14: #{tpu_custom_call.1} parent=11 // pred_check_branch
          %241 = sbr.rel (%p239) target = $region16
        $region15: #{tpu_custom_call.1} parent=11 // pred_region
          %s242 = smul.u32 64, %s32
          %s244 = ssub.s32 4096, 4096
          %245 = vsyncadd [#allocation8], %s244
          %s246 = smul.addr %s242, 64
          %s247 = scalar_lea.hbm %s1, %s246
          %s248 = sshll.u32 [#allocation7], 4
          %s249 = int_to_ptr.vmem [resolvable:$true] %s248
          %254 = dma.hbm_to_vmem [thread:$0]  %s247, 4096, %s249, [#allocation8], 64, 64, 4
        $region16: #{tpu_custom_call.1} parent=11 // pred_fallthru
          _
        // Predicated region
        $region17: #{tpu_custom_call.1} parent=11 // pred_check
          %p255 = pneg %p109
        $region18: #{tpu_custom_call.1} parent=11 // pred_check_branch
          %257 = sbr.rel (%p255) target = $region20
        $region19: #{tpu_custom_call.1} parent=11 // pred_region
          %s259 = ssub.s32 1024, 1024
          %260 = vsyncadd [#allocation8], %s259
          %s261 = sshll.u32 [#allocation9], 4
          %s262 = int_to_ptr.vmem [resolvable:$true] %s261
          %267 = dma.hbm_to_vmem [thread:$0]  %s2, 1024, %s262, [#allocation8], 64, 64, 4
        $region20: #{tpu_custom_call.1} parent=11 // pred_fallthru
          _
        // Predicated region
        $region21: #{tpu_custom_call.1} parent=11 // pred_check
          %p268 = pneg %p130
        $region22: #{tpu_custom_call.1} parent=11 // pred_check_branch
          %270 = sbr.rel (%p268) target = $region24
        $region23: #{tpu_custom_call.1} parent=11 // pred_region
          _
        $region24: #{tpu_custom_call.1} parent=11 // pred_fallthru
          _
        // Predicated region
        $region25: #{tpu_custom_call.1} parent=11 // pred_check
          %p271 = pneg %p151
        $region26: #{tpu_custom_call.1} parent=11 // pred_check_branch
          %273 = sbr.rel (%p271) target = $region28
        $region27: #{tpu_custom_call.1} parent=11 // pred_region
          _
        $region28: #{tpu_custom_call.1} parent=11 // pred_fallthru
          _
        // Predicated region
        $region29: #{tpu_custom_call.1} parent=11 // pred_check
          %p274 = pneg %p172
        $region30: #{tpu_custom_call.1} parent=11 // pred_check_branch
          %276 = sbr.rel (%p274) target = $region32
        $region31: #{tpu_custom_call.1} parent=11 // pred_region
          _
        $region32: #{tpu_custom_call.1} parent=11 // pred_fallthru
          _
      $region12: #{tpu_custom_call.1} parent=5 // pred_fallthru
        _
      %p277 = scmp.lt.s32.totalorder %s22, 2
      // Predicated region
      $region33: #{tpu_custom_call.1} parent=5 // pred_check
        %p278 = pneg %p277
      $region34: #{tpu_custom_call.1} parent=5 // pred_check_branch
        %280 = sbr.rel (%p278) target = $region36
      $region35: #{tpu_custom_call.1} parent=5 // pred_region
        // Predicated region
        $region37: #{tpu_custom_call.1} parent=35 // pred_check
          %p281 = pneg %p56
        $region38: #{tpu_custom_call.1} parent=35 // pred_check_branch
          %283 = sbr.rel (%p281) target = $region40
        $region39: #{tpu_custom_call.1} parent=35 // pred_region
          %s284 = sand.u32 %s46, 1
          %s285 = scalar_lea.sflag [#allocation5], %s284
          %s286 = sand.u32 %s46, 1
          %s287 = smul.addr %s286, 512
          %s288 = scalar_lea.vmem [#allocation4], %s287
          %s289 = smul.u32 32, %s29
          %s290 = smul.u32 4, %s30
          %s292 = ssub.s32 8192, 8192
          %293 = vsyncadd %s285, %s292
          %s294 = smul.addr %s289, 4
          %s295 = sadd.s32 %s290, %s294
          %s296 = smul.addr %s295, 64
          %s297 = scalar_lea.hbm %s0, %s296
          %s298 = sshll.u32 %s288, 4
          %s299 = int_to_ptr.vmem [resolvable:$true] %s298
          %304 = dma.hbm_to_vmem [thread:$0]  %s297, 8192, %s299, %s285, 256, 256, 16
        $region40: #{tpu_custom_call.1} parent=35 // pred_fallthru
          _
      $region36: #{tpu_custom_call.1} parent=5 // pred_fallthru
        _
      %p305 = scmp.le.s32.totalorder 1, %s22
      %p306 = scmp.lt.s32.totalorder %s22, 3
      %p307 = pnand %p305, %p306
      %p308 = pneg %p307
      // Predicated region
      $region41: #{tpu_custom_call.1} parent=5 // pred_check
        _
      $region42: #{tpu_custom_call.1} parent=5 // pred_check_branch
        %310 = sbr.rel (%p307) target = $region44
      $region43: #{tpu_custom_call.1} parent=5 // pred_region
        %s311 = ssub.s32 %s22, 1
        %s312 = sand.u32 %s49, 1
        %s313 = scalar_lea.sflag [#allocation5], %s312
        %s314 = sand.u32 %s49, 1
        %s315 = smul.addr %s314, 512
        %s316 = scalar_lea.vmem [#allocation4], %s315
        // Predicated region
        $region45: #{tpu_custom_call.1} parent=43 // pred_check
          %p317 = pneg %p62
        $region46: #{tpu_custom_call.1} parent=43 // pred_check_branch
          %319 = sbr.rel (%p317) target = $region48
        $region47: #{tpu_custom_call.1} parent=43 // pred_region
          %320 = dma.done %s313, 8192
        $region48: #{tpu_custom_call.1} parent=43 // pred_fallthru
          _
        // Predicated region
        $region49: #{tpu_custom_call.1} parent=43 // pred_check
          %p321 = pneg %p88
        $region50: #{tpu_custom_call.1} parent=43 // pred_check_branch
          %323 = sbr.rel (%p321) target = $region52
        $region51: #{tpu_custom_call.1} parent=43 // pred_region
          %324 = dma.done [#allocation8], 4096
        $region52: #{tpu_custom_call.1} parent=43 // pred_fallthru
          _
        // Predicated region
        $region53: #{tpu_custom_call.1} parent=43 // pred_check
          %p325 = pneg %p109
        $region54: #{tpu_custom_call.1} parent=43 // pred_check_branch
          %327 = sbr.rel (%p325) target = $region56
        $region55: #{tpu_custom_call.1} parent=43 // pred_region
          %328 = dma.done [#allocation8], 1024
        $region56: #{tpu_custom_call.1} parent=43 // pred_fallthru
          _
        %s329 = sand.u32 %s49, 1
        %s330 = scalar_lea.sflag [#allocation5], %s329
        %s331 = sand.u32 %s49, 1
        %s332 = smul.addr %s331, 512
        %s333 = scalar_lea.vmem [#allocation4], %s332
        %p334 = pneg %p62
        %p335 = pneg %p59
        %p336 = pneg %p88
        %p337 = pneg %p85
        %p338 = pneg %p109
        %p339 = pneg %p106
        %p340 = pneg %p130
        %p341 = pneg %p127
        %p342 = pneg %p151
        %p343 = pneg %p148
        %p344 = pneg %p172
        %p345 = pneg %p169
        %p346 = pneg %p198
        %p347 = pneg %p195
        %s348 = smul.u32 32, %s31
        %p349 = scmp.lt.s32.totalorder %s348, 63
        %s350 = scalar_select %p349, %s348, 63
        %s351 = smul.addr %s350, 8
        %s352 = scalar_lea.vmem %s6, %s351
        %p353 = pneg %p224
        %p354 = pneg %p221
        %s355 = sand.u32 %s211, 1
        %s356 = scalar_lea.sflag [#allocation6], %s355
        %s357 = sand.u32 %s211, 1
        %s358 = smul.addr %s357, 256
        %s359 = scalar_lea.vmem [#allocation10], %s358
        %s360 = smul.u32 32, %s31
        %s361 = smul.u32 4, %s32
        %s362 = smul.u32 64, %s32
        %s363 = smul.u32 32, %s31
        %p364 = scmp.lt.s32.totalorder %s363, 63
        %s365 = scalar_select %p364, %s363, 63
        %s366 = smul.addr %s365, 8
        %s367 = scalar_lea.vmem %s6, %s366
        %s368 = smul.u32 32, %s31
        %s369 = smul.u32 32, %s31
        %p371 = scmp.eq.s32.totalorder %s32, 0
        // Predicated region
        $region57: #{tpu_custom_call.1} parent=43 // pred_check
          %p372 = pneg %p371
        $region58: #{tpu_custom_call.1} parent=43 // pred_check_branch
          %374 = sbr.rel (%p372) target = $region60
        $region59: #{tpu_custom_call.1} parent=43 // pred_region
          %375 = vst [vmem:[#allocation2] sm:$0xff] 0.0
          %376 = vst [vmem:[#allocation2 + $0x8] sm:$0xff] 0.0
          %377 = vst [vmem:[#allocation2 + $0x10] sm:$0xff] 0.0
          %378 = vst [vmem:[#allocation2 + $0x18] sm:$0xff] 0.0
          %379 = vst [vmem:[#allocation2 + $0x20] sm:$0xff] 0.0
          %380 = vst [vmem:[#allocation2 + $0x28] sm:$0xff] 0.0
          %381 = vst [vmem:[#allocation2 + $0x30] sm:$0xff] 0.0
          %382 = vst [vmem:[#allocation2 + $0x38] sm:$0xff] 0.0
          %383 = vst [vmem:[#allocation2 + $0x40] sm:$0xff] 0.0
          %384 = vst [vmem:[#allocation2 + $0x48] sm:$0xff] 0.0
          %385 = vst [vmem:[#allocation2 + $0x50] sm:$0xff] 0.0
          %386 = vst [vmem:[#allocation2 + $0x58] sm:$0xff] 0.0
          %387 = vst [vmem:[#allocation2 + $0x60] sm:$0xff] 0.0
          %388 = vst [vmem:[#allocation2 + $0x68] sm:$0xff] 0.0
          %389 = vst [vmem:[#allocation2 + $0x70] sm:$0xff] 0.0
          %390 = vst [vmem:[#allocation2 + $0x78] sm:$0xff] 0.0
          %391 = vst [vmem:[#allocation2 + $0x80] sm:$0xff] 0.0
          %392 = vst [vmem:[#allocation2 + $0x88] sm:$0xff] 0.0
          %393 = vst [vmem:[#allocation2 + $0x90] sm:$0xff] 0.0
          %394 = vst [vmem:[#allocation2 + $0x98] sm:$0xff] 0.0
          %395 = vst [vmem:[#allocation2 + $0xa0] sm:$0xff] 0.0
          %396 = vst [vmem:[#allocation2 + $0xa8] sm:$0xff] 0.0
          %397 = vst [vmem:[#allocation2 + $0xb0] sm:$0xff] 0.0
          %398 = vst [vmem:[#allocation2 + $0xb8] sm:$0xff] 0.0
          %399 = vst [vmem:[#allocation2 + $0xc0] sm:$0xff] 0.0
          %400 = vst [vmem:[#allocation2 + $0xc8] sm:$0xff] 0.0
          %401 = vst [vmem:[#allocation2 + $0xd0] sm:$0xff] 0.0
          %402 = vst [vmem:[#allocation2 + $0xd8] sm:$0xff] 0.0
          %403 = vst [vmem:[#allocation2 + $0xe0] sm:$0xff] 0.0
          %404 = vst [vmem:[#allocation2 + $0xe8] sm:$0xff] 0.0
          %405 = vst [vmem:[#allocation2 + $0xf0] sm:$0xff] 0.0
          %406 = vst [vmem:[#allocation2 + $0xf8] sm:$0xff] 0.0
        $region60: #{tpu_custom_call.1} parent=43 // pred_fallthru
          _
        %v407 = vld [vmem:[#allocation7] sm:$0xf]
        %v408 = vld [vmem:[#allocation7 + $0x4] sm:$0xf]
        %v409 = vld [vmem:[#allocation7 + $0x8] sm:$0xf]
        %v410 = vld [vmem:[#allocation7 + $0xc] sm:$0xf]
        %v411 = vld [vmem:[#allocation7 + $0x10] sm:$0xf]
        %v412 = vld [vmem:[#allocation7 + $0x14] sm:$0xf]
        %v413 = vld [vmem:[#allocation7 + $0x18] sm:$0xf]
        %v414 = vld [vmem:[#allocation7 + $0x1c] sm:$0xf]
        %v415 = vld [vmem:[#allocation7 + $0x20] sm:$0xf]
        %v416 = vld [vmem:[#allocation7 + $0x24] sm:$0xf]
        %v417 = vld [vmem:[#allocation7 + $0x28] sm:$0xf]
        %v418 = vld [vmem:[#allocation7 + $0x2c] sm:$0xf]
        %v419 = vld [vmem:[#allocation7 + $0x30] sm:$0xf]
        %v420 = vld [vmem:[#allocation7 + $0x34] sm:$0xf]
        %v421 = vld [vmem:[#allocation7 + $0x38] sm:$0xf]
        %v422 = vld [vmem:[#allocation7 + $0x3c] sm:$0xf]
        %v423 = vld [vmem:[#allocation7 + $0x40] sm:$0xf]
        %v424 = vld [vmem:[#allocation7 + $0x44] sm:$0xf]
        %v425 = vld [vmem:[#allocation7 + $0x48] sm:$0xf]
        %v426 = vld [vmem:[#allocation7 + $0x4c] sm:$0xf]
        %v427 = vld [vmem:[#allocation7 + $0x50] sm:$0xf]
        %v428 = vld [vmem:[#allocation7 + $0x54] sm:$0xf]
        %v429 = vld [vmem:[#allocation7 + $0x58] sm:$0xf]
        %v430 = vld [vmem:[#allocation7 + $0x5c] sm:$0xf]
        %v431 = vld [vmem:[#allocation7 + $0x60] sm:$0xf]
        %v432 = vld [vmem:[#allocation7 + $0x64] sm:$0xf]
        %v433 = vld [vmem:[#allocation7 + $0x68] sm:$0xf]
        %v434 = vld [vmem:[#allocation7 + $0x6c] sm:$0xf]
        %v435 = vld [vmem:[#allocation7 + $0x70] sm:$0xf]
        %v436 = vld [vmem:[#allocation7 + $0x74] sm:$0xf]
        %v437 = vld [vmem:[#allocation7 + $0x78] sm:$0xf]
        %v438 = vld [vmem:[#allocation7 + $0x7c] sm:$0xf]
        %v439 = vld [vmem:[#allocation7 + $0x80] sm:$0xf]
        %v440 = vld [vmem:[#allocation7 + $0x84] sm:$0xf]
        %v441 = vld [vmem:[#allocation7 + $0x88] sm:$0xf]
        %v442 = vld [vmem:[#allocation7 + $0x8c] sm:$0xf]
        %v443 = vld [vmem:[#allocation7 + $0x90] sm:$0xf]
        %v444 = vld [vmem:[#allocation7 + $0x94] sm:$0xf]
        %v445 = vld [vmem:[#allocation7 + $0x98] sm:$0xf]
        %v446 = vld [vmem:[#allocation7 + $0x9c] sm:$0xf]
        %v447 = vld [vmem:[#allocation7 + $0xa0] sm:$0xf]
        %v448 = vld [vmem:[#allocation7 + $0xa4] sm:$0xf]
        %v449 = vld [vmem:[#allocation7 + $0xa8] sm:$0xf]
        %v450 = vld [vmem:[#allocation7 + $0xac] sm:$0xf]
        %v451 = vld [vmem:[#allocation7 + $0xb0] sm:$0xf]
        %v452 = vld [vmem:[#allocation7 + $0xb4] sm:$0xf]
        %v453 = vld [vmem:[#allocation7 + $0xb8] sm:$0xf]
        %v454 = vld [vmem:[#allocation7 + $0xbc] sm:$0xf]
        %v455 = vld [vmem:[#allocation7 + $0xc0] sm:$0xf]
        %v456 = vld [vmem:[#allocation7 + $0xc4] sm:$0xf]
        %v457 = vld [vmem:[#allocation7 + $0xc8] sm:$0xf]
        %v458 = vld [vmem:[#allocation7 + $0xcc] sm:$0xf]
        %v459 = vld [vmem:[#allocation7 + $0xd0] sm:$0xf]
        %v460 = vld [vmem:[#allocation7 + $0xd4] sm:$0xf]
        %v461 = vld [vmem:[#allocation7 + $0xd8] sm:$0xf]
        %v462 = vld [vmem:[#allocation7 + $0xdc] sm:$0xf]
        %v463 = vld [vmem:[#allocation7 + $0xe0] sm:$0xf]
        %v464 = vld [vmem:[#allocation7 + $0xe4] sm:$0xf]
        %v465 = vld [vmem:[#allocation7 + $0xe8] sm:$0xf]
        %v466 = vld [vmem:[#allocation7 + $0xec] sm:$0xf]
        %v467 = vld [vmem:[#allocation7 + $0xf0] sm:$0xf]
        %v468 = vld [vmem:[#allocation7 + $0xf4] sm:$0xf]
        %v469 = vld [vmem:[#allocation7 + $0xf8] sm:$0xf]
        %v470 = vld [vmem:[#allocation7 + $0xfc] sm:$0xf]
        %v471 = vld [vmem:[#allocation9] sm:$0xf]
        %v472 = vld [vmem:[#allocation9 + $0x4] sm:$0xf]
        %v473 = vld [vmem:[#allocation9 + $0x8] sm:$0xf]
        %v474 = vld [vmem:[#allocation9 + $0xc] sm:$0xf]
        %v475 = vld [vmem:[#allocation9 + $0x10] sm:$0xf]
        %v476 = vld [vmem:[#allocation9 + $0x14] sm:$0xf]
        %v477 = vld [vmem:[#allocation9 + $0x18] sm:$0xf]
        %v478 = vld [vmem:[#allocation9 + $0x1c] sm:$0xf]
        %v479 = vld [vmem:[#allocation9 + $0x20] sm:$0xf]
        %v480 = vld [vmem:[#allocation9 + $0x24] sm:$0xf]
        %v481 = vld [vmem:[#allocation9 + $0x28] sm:$0xf]
        %v482 = vld [vmem:[#allocation9 + $0x2c] sm:$0xf]
        %v483 = vld [vmem:[#allocation9 + $0x30] sm:$0xf]
        %v484 = vld [vmem:[#allocation9 + $0x34] sm:$0xf]
        %v485 = vld [vmem:[#allocation9 + $0x38] sm:$0xf]
        %v486 = vld [vmem:[#allocation9 + $0x3c] sm:$0xf]
        %v551 = vunpack.c.l.b16 %v407
        %v552 = vunpack.c.l.b16 %v408
        %v553 = vunpack.c.l.b16 %v409
        %v554 = vunpack.c.l.b16 %v410
        %v555 = vunpack.c.l.b16 %v411
        %v556 = vunpack.c.l.b16 %v412
        %v557 = vunpack.c.l.b16 %v413
        %v558 = vunpack.c.l.b16 %v414
        %v559 = vunpack.c.l.b16 %v415
        %v560 = vunpack.c.l.b16 %v416
        %v561 = vunpack.c.l.b16 %v417
        %v562 = vunpack.c.l.b16 %v418
        %v563 = vunpack.c.l.b16 %v419
        %v564 = vunpack.c.l.b16 %v420
        %v565 = vunpack.c.l.b16 %v421
        %v566 = vunpack.c.l.b16 %v422
        %v567 = vunpack.c.l.b16 %v423
        %v568 = vunpack.c.l.b16 %v424
        %v569 = vunpack.c.l.b16 %v425
        %v570 = vunpack.c.l.b16 %v426
        %v571 = vunpack.c.l.b16 %v427
        %v572 = vunpack.c.l.b16 %v428
        %v573 = vunpack.c.l.b16 %v429
        %v574 = vunpack.c.l.b16 %v430
        %v575 = vunpack.c.l.b16 %v431
        %v576 = vunpack.c.l.b16 %v432
        %v577 = vunpack.c.l.b16 %v433
        %v578 = vunpack.c.l.b16 %v434
        %v579 = vunpack.c.l.b16 %v435
        %v580 = vunpack.c.l.b16 %v436
        %v581 = vunpack.c.l.b16 %v437
        %v582 = vunpack.c.l.b16 %v438
        %v583 = vunpack.c.l.b16 %v439
        %v584 = vunpack.c.l.b16 %v440
        %v585 = vunpack.c.l.b16 %v441
        %v586 = vunpack.c.l.b16 %v442
        %v587 = vunpack.c.l.b16 %v443
        %v588 = vunpack.c.l.b16 %v444
        %v589 = vunpack.c.l.b16 %v445
        %v590 = vunpack.c.l.b16 %v446
        %v591 = vunpack.c.l.b16 %v447
        %v592 = vunpack.c.l.b16 %v448
        %v593 = vunpack.c.l.b16 %v449
        %v594 = vunpack.c.l.b16 %v450
        %v595 = vunpack.c.l.b16 %v451
        %v596 = vunpack.c.l.b16 %v452
        %v597 = vunpack.c.l.b16 %v453
        %v598 = vunpack.c.l.b16 %v454
        %v599 = vunpack.c.l.b16 %v455
        %v600 = vunpack.c.l.b16 %v456
        %v601 = vunpack.c.l.b16 %v457
        %v602 = vunpack.c.l.b16 %v458
        %v603 = vunpack.c.l.b16 %v459
        %v604 = vunpack.c.l.b16 %v460
        %v605 = vunpack.c.l.b16 %v461
        %v606 = vunpack.c.l.b16 %v462
        %v607 = vunpack.c.l.b16 %v463
        %v608 = vunpack.c.l.b16 %v464
        %v609 = vunpack.c.l.b16 %v465
        %v610 = vunpack.c.l.b16 %v466
        %v611 = vunpack.c.l.b16 %v467
        %v612 = vunpack.c.l.b16 %v468
        %v613 = vunpack.c.l.b16 %v469
        %v614 = vunpack.c.l.b16 %v470
        %v615 = vpack.c.b16 %v552, %v551
        %v616 = vpack.c.b16 %v554, %v553
        %v617 = vpack.c.b16 %v556, %v555
        %v618 = vpack.c.b16 %v558, %v557
        %v619 = vpack.c.b16 %v560, %v559
        %v620 = vpack.c.b16 %v562, %v561
        %v621 = vpack.c.b16 %v564, %v563
        %v622 = vpack.c.b16 %v566, %v565
        %v623 = vpack.c.b16 %v568, %v567
        %v624 = vpack.c.b16 %v570, %v569
        %v625 = vpack.c.b16 %v572, %v571
        %v626 = vpack.c.b16 %v574, %v573
        %v627 = vpack.c.b16 %v576, %v575
        %v628 = vpack.c.b16 %v578, %v577
        %v629 = vpack.c.b16 %v580, %v579
        %v630 = vpack.c.b16 %v582, %v581
        %v631 = vpack.c.b16 %v584, %v583
        %v632 = vpack.c.b16 %v586, %v585
        %v633 = vpack.c.b16 %v588, %v587
        %v634 = vpack.c.b16 %v590, %v589
        %v635 = vpack.c.b16 %v592, %v591
        %v636 = vpack.c.b16 %v594, %v593
        %v637 = vpack.c.b16 %v596, %v595
        %v638 = vpack.c.b16 %v598, %v597
        %v639 = vpack.c.b16 %v600, %v599
        %v640 = vpack.c.b16 %v602, %v601
        %v641 = vpack.c.b16 %v604, %v603
        %v642 = vpack.c.b16 %v606, %v605
        %v643 = vpack.c.b16 %v608, %v607
        %v644 = vpack.c.b16 %v610, %v609
        %v645 = vpack.c.b16 %v612, %v611
        %v646 = vpack.c.b16 %v614, %v613
        %v695 = vunpack.c.l.b16 %v471
        %v696 = vunpack.c.l.b16 %v472
        %v697 = vunpack.c.l.b16 %v473
        %v698 = vunpack.c.l.b16 %v474
        %v699 = vunpack.c.l.b16 %v475
        %v700 = vunpack.c.l.b16 %v476
        %v701 = vunpack.c.l.b16 %v477
        %v702 = vunpack.c.l.b16 %v478
        %v703 = vunpack.c.l.b16 %v479
        %v704 = vunpack.c.l.b16 %v480
        %v705 = vunpack.c.l.b16 %v481
        %v706 = vunpack.c.l.b16 %v482
        %v707 = vunpack.c.l.b16 %v483
        %v708 = vunpack.c.l.b16 %v484
        %v709 = vunpack.c.l.b16 %v485
        %v710 = vunpack.c.l.b16 %v486
        %v711 = vpack.c.b16 %v696, %v695
        %v712 = vpack.c.b16 %v698, %v697
        %v713 = vpack.c.b16 %v700, %v699
        %v714 = vpack.c.b16 %v702, %v701
        %v715 = vpack.c.b16 %v704, %v703
        %v716 = vpack.c.b16 %v706, %v705
        %v717 = vpack.c.b16 %v708, %v707
        %v718 = vpack.c.b16 %v710, %v709
        %727 = vmatprep.subr.bf16.mxu0 0
        %728 = vmatpush1.bf16.msra.mxu0 %v711
        %729 = vmatprep.subr.bf16.mxu0 0
        %730 = vmatpush1.bf16.msra.mxu0 %v712
        %731 = vmatprep.subr.bf16.mxu0 0
        %732 = vmatpush1.bf16.msra.mxu0 %v713
        %733 = vmatprep.subr.bf16.mxu0 0
        %734 = vmatpush1.bf16.msra.mxu0 %v714
        %735 = vmatprep.subr.bf16.mxu0 0
        %736 = vmatpush1.bf16.msra.mxu0 %v715
        %737 = vmatprep.subr.bf16.mxu0 0
        %738 = vmatpush1.bf16.msra.mxu0 %v716
        %739 = vmatprep.subr.bf16.mxu0 0
        %740 = vmatpush1.bf16.msra.mxu0 %v717
        %741 = vmatprep.subr.bf16.mxu0 0
        %742 = vmatpush1.bf16.msra.mxu0 %v718
        %743 = vmatprep.subr.bf16.mxu0 0
        %744 = vmatpush1.bf16.msra.mxu0 0
        %745 = vmatprep.subr.bf16.mxu0 0
        %746 = vmatpush1.bf16.msra.mxu0 0
        %747 = vmatprep.subr.bf16.mxu0 0
        %748 = vmatpush1.bf16.msra.mxu0 0
        %749 = vmatprep.subr.bf16.mxu0 0
        %750 = vmatpush1.bf16.msra.mxu0 0
        %751 = vmatprep.subr.bf16.mxu0 0
        %752 = vmatpush1.bf16.msra.mxu0 0
        %753 = vmatprep.subr.bf16.mxu0 0
        %754 = vmatpush1.bf16.msra.mxu0 0
        %755 = vmatprep.subr.bf16.mxu0 0
        %756 = vmatpush1.bf16.msra.mxu0 0
        %757 = vmatprep.subr.bf16.mxu0 0
        %758 = vmatpush1.bf16.msra.mxu0 0
        %759 = vmatprep.mubr.bf16.mxu0 0
        %760 = vmatmul.mubr.bf16.gmra.mrb[0].mxu0 %v615
        %v761 = vpop.f32.mrb[0].mxu0
        %v762 = vadd.f32 0.0, %v761
        %v763 = vpop.f32.mrb[0].mxu0
        %v764 = vpop.f32.mrb[0].mxu0
        %v765 = vadd.f32 0.0, %v764
        %v766 = vpop.f32.mrb[0].mxu0
        %767 = vmatprep.mubr.bf16.mxu0 0
        %768 = vmatmul.mubr.bf16.gmra.mrb[0].mxu0 %v616
        %v769 = vpop.f32.mrb[0].mxu0
        %v770 = vadd.f32 0.0, %v769
        %v771 = vpop.f32.mrb[0].mxu0
        %v772 = vpop.f32.mrb[0].mxu0
        %v773 = vadd.f32 0.0, %v772
        %v774 = vpop.f32.mrb[0].mxu0
        %775 = vmatprep.mubr.bf16.mxu0 0
        %776 = vmatmul.mubr.bf16.gmra.mrb[0].mxu0 %v617
        %v777 = vpop.f32.mrb[0].mxu0
        %v778 = vadd.f32 0.0, %v777
        %v779 = vpop.f32.mrb[0].mxu0
        %v780 = vpop.f32.mrb[0].mxu0
        %v781 = vadd.f32 0.0, %v780
        %v782 = vpop.f32.mrb[0].mxu0
        %783 = vmatprep.mubr.bf16.mxu0 0
        %784 = vmatmul.mubr.bf16.gmra.mrb[0].mxu0 %v618
        %v785 = vpop.f32.mrb[0].mxu0
        %v786 = vadd.f32 0.0, %v785
        %v787 = vpop.f32.mrb[0].mxu0
        %v788 = vpop.f32.mrb[0].mxu0
        %v789 = vadd.f32 0.0, %v788
        %v790 = vpop.f32.mrb[0].mxu0
        %791 = vmatprep.mubr.bf16.mxu0 0
        %792 = vmatmul.mubr.bf16.gmra.mrb[0].mxu0 %v619
        %v793 = vpop.f32.mrb[0].mxu0
        %v794 = vadd.f32 0.0, %v793
        %v795 = vpop.f32.mrb[0].mxu0
        %v796 = vpop.f32.mrb[0].mxu0
        %v797 = vadd.f32 0.0, %v796
        %v798 = vpop.f32.mrb[0].mxu0
        %799 = vmatprep.mubr.bf16.mxu0 0
        %800 = vmatmul.mubr.bf16.gmra.mrb[0].mxu0 %v620
        %v801 = vpop.f32.mrb[0].mxu0
        %v802 = vadd.f32 0.0, %v801
        %v803 = vpop.f32.mrb[0].mxu0
        %v804 = vpop.f32.mrb[0].mxu0
        %v805 = vadd.f32 0.0, %v804
        %v806 = vpop.f32.mrb[0].mxu0
        %807 = vmatprep.mubr.bf16.mxu0 0
        %808 = vmatmul.mubr.bf16.gmra.mrb[0].mxu0 %v621
        %v809 = vpop.f32.mrb[0].mxu0
        %v810 = vadd.f32 0.0, %v809
        %v811 = vpop.f32.mrb[0].mxu0
        %v812 = vpop.f32.mrb[0].mxu0
        %v813 = vadd.f32 0.0, %v812
        %v814 = vpop.f32.mrb[0].mxu0
        %815 = vmatprep.mubr.bf16.mxu0 0
        %816 = vmatmul.mubr.bf16.gmra.mrb[0].mxu0 %v622
        %v817 = vpop.f32.mrb[0].mxu0
        %v818 = vadd.f32 0.0, %v817
        %v819 = vpop.f32.mrb[0].mxu0
        %v820 = vpop.f32.mrb[0].mxu0
        %v821 = vadd.f32 0.0, %v820
        %v822 = vpop.f32.mrb[0].mxu0
        %823 = vmatprep.mubr.bf16.mxu0 0
        %824 = vmatmul.mubr.bf16.gmra.mrb[0].mxu0 %v623
        %v825 = vpop.f32.mrb[0].mxu0
        %v826 = vadd.f32 0.0, %v825
        %v827 = vpop.f32.mrb[0].mxu0
        %v828 = vpop.f32.mrb[0].mxu0
        %v829 = vadd.f32 0.0, %v828
        %v830 = vpop.f32.mrb[0].mxu0
        %831 = vmatprep.mubr.bf16.mxu0 0
        %832 = vmatmul.mubr.bf16.gmra.mrb[0].mxu0 %v624
        %v833 = vpop.f32.mrb[0].mxu0
        %v834 = vadd.f32 0.0, %v833
        %v835 = vpop.f32.mrb[0].mxu0
        %v836 = vpop.f32.mrb[0].mxu0
        %v837 = vadd.f32 0.0, %v836
        %v838 = vpop.f32.mrb[0].mxu0
        %839 = vmatprep.mubr.bf16.mxu0 0
        %840 = vmatmul.mubr.bf16.gmra.mrb[0].mxu0 %v625
        %v841 = vpop.f32.mrb[0].mxu0
        %v842 = vadd.f32 0.0, %v841
        %v843 = vpop.f32.mrb[0].mxu0
        %v844 = vpop.f32.mrb[0].mxu0
        %v845 = vadd.f32 0.0, %v844
        %v846 = vpop.f32.mrb[0].mxu0
        %847 = vmatprep.mubr.bf16.mxu0 0
        %848 = vmatmul.mubr.bf16.gmra.mrb[0].mxu0 %v626
        %v849 = vpop.f32.mrb[0].mxu0
        %v850 = vadd.f32 0.0, %v849
        %v851 = vpop.f32.mrb[0].mxu0
        %v852 = vpop.f32.mrb[0].mxu0
        %v853 = vadd.f32 0.0, %v852
        %v854 = vpop.f32.mrb[0].mxu0
        %855 = vmatprep.mubr.bf16.mxu0 0
        %856 = vmatmul.mubr.bf16.gmra.mrb[0].mxu0 %v627
        %v857 = vpop.f32.mrb[0].mxu0
        %v858 = vadd.f32 0.0, %v857
        %v859 = vpop.f32.mrb[0].mxu0
        %v860 = vpop.f32.mrb[0].mxu0
        %v861 = vadd.f32 0.0, %v860
        %v862 = vpop.f32.mrb[0].mxu0
        %863 = vmatprep.mubr.bf16.mxu0 0
        %864 = vmatmul.mubr.bf16.gmra.mrb[0].mxu0 %v628
        %v865 = vpop.f32.mrb[0].mxu0
        %v866 = vadd.f32 0.0, %v865
        %v867 = vpop.f32.mrb[0].mxu0
        %v868 = vpop.f32.mrb[0].mxu0
        %v869 = vadd.f32 0.0, %v868
        %v870 = vpop.f32.mrb[0].mxu0
        %871 = vmatprep.mubr.bf16.mxu0 0
        %872 = vmatmul.mubr.bf16.gmra.mrb[0].mxu0 %v629
        %v873 = vpop.f32.mrb[0].mxu0
        %v874 = vadd.f32 0.0, %v873
        %v875 = vpop.f32.mrb[0].mxu0
        %v876 = vpop.f32.mrb[0].mxu0
        %v877 = vadd.f32 0.0, %v876
        %v878 = vpop.f32.mrb[0].mxu0
        %879 = vmatprep.mubr.bf16.mxu0 0
        %880 = vmatmul.mubr.bf16.gmra.mrb[0].mxu0 %v630
        %v881 = vpop.f32.mrb[0].mxu0
        %v882 = vadd.f32 0.0, %v881
        %v883 = vpop.f32.mrb[0].mxu0
        %v884 = vpop.f32.mrb[0].mxu0
        %v885 = vadd.f32 0.0, %v884
        %v886 = vpop.f32.mrb[0].mxu0
        %887 = vmatprep.mubr.bf16.mxu0 0
        %888 = vmatmul.mubr.bf16.gmra.mrb[0].mxu0 %v631
        %v889 = vpop.f32.mrb[0].mxu0
        %v890 = vadd.f32 0.0, %v889
        %v891 = vpop.f32.mrb[0].mxu0
        %v892 = vpop.f32.mrb[0].mxu0
        %v893 = vadd.f32 0.0, %v892
        %v894 = vpop.f32.mrb[0].mxu0
        %895 = vmatprep.mubr.bf16.mxu0 0
        %896 = vmatmul.mubr.bf16.gmra.mrb[0].mxu0 %v632
        %v897 = vpop.f32.mrb[0].mxu0
        %v898 = vadd.f32 0.0, %v897
        %v899 = vpop.f32.mrb[0].mxu0
        %v900 = vpop.f32.mrb[0].mxu0
        %v901 = vadd.f32 0.0, %v900
        %v902 = vpop.f32.mrb[0].mxu0
        %903 = vmatprep.mubr.bf16.mxu0 0
        %904 = vmatmul.mubr.bf16.gmra.mrb[0].mxu0 %v633
        %v905 = vpop.f32.mrb[0].mxu0
        %v906 = vadd.f32 0.0, %v905
        %v907 = vpop.f32.mrb[0].mxu0
        %v908 = vpop.f32.mrb[0].mxu0
        %v909 = vadd.f32 0.0, %v908
        %v910 = vpop.f32.mrb[0].mxu0
        %911 = vmatprep.mubr.bf16.mxu0 0
        %912 = vmatmul.mubr.bf16.gmra.mrb[0].mxu0 %v634
        %v913 = vpop.f32.mrb[0].mxu0
        %v914 = vadd.f32 0.0, %v913
        %v915 = vpop.f32.mrb[0].mxu0
        %v916 = vpop.f32.mrb[0].mxu0
        %v917 = vadd.f32 0.0, %v916
        %v918 = vpop.f32.mrb[0].mxu0
        %919 = vmatprep.mubr.bf16.mxu0 0
        %920 = vmatmul.mubr.bf16.gmra.mrb[0].mxu0 %v635
        %v921 = vpop.f32.mrb[0].mxu0
        %v922 = vadd.f32 0.0, %v921
        %v923 = vpop.f32.mrb[0].mxu0
        %v924 = vpop.f32.mrb[0].mxu0
        %v925 = vadd.f32 0.0, %v924
        %v926 = vpop.f32.mrb[0].mxu0
        %927 = vmatprep.mubr.bf16.mxu0 0
        %928 = vmatmul.mubr.bf16.gmra.mrb[0].mxu0 %v636
        %v929 = vpop.f32.mrb[0].mxu0
        %v930 = vadd.f32 0.0, %v929
        %v931 = vpop.f32.mrb[0].mxu0
        %v932 = vpop.f32.mrb[0].mxu0
        %v933 = vadd.f32 0.0, %v932
        %v934 = vpop.f32.mrb[0].mxu0
        %935 = vmatprep.mubr.bf16.mxu0 0
        %936 = vmatmul.mubr.bf16.gmra.mrb[0].mxu0 %v637
        %v937 = vpop.f32.mrb[0].mxu0
        %v938 = vadd.f32 0.0, %v937
        %v939 = vpop.f32.mrb[0].mxu0
        %v940 = vpop.f32.mrb[0].mxu0
        %v941 = vadd.f32 0.0, %v940
        %v942 = vpop.f32.mrb[0].mxu0
        %943 = vmatprep.mubr.bf16.mxu0 0
        %944 = vmatmul.mubr.bf16.gmra.mrb[0].mxu0 %v638
        %v945 = vpop.f32.mrb[0].mxu0
        %v946 = vadd.f32 0.0, %v945
        %v947 = vpop.f32.mrb[0].mxu0
        %v948 = vpop.f32.mrb[0].mxu0
        %v949 = vadd.f32 0.0, %v948
        %v950 = vpop.f32.mrb[0].mxu0
        %951 = vmatprep.mubr.bf16.mxu0 0
        %952 = vmatmul.mubr.bf16.gmra.mrb[0].mxu0 %v639
        %v953 = vpop.f32.mrb[0].mxu0
        %v954 = vadd.f32 0.0, %v953
        %v955 = vpop.f32.mrb[0].mxu0
        %v956 = vpop.f32.mrb[0].mxu0
        %v957 = vadd.f32 0.0, %v956
        %v958 = vpop.f32.mrb[0].mxu0
        %959 = vmatprep.mubr.bf16.mxu0 0
        %960 = vmatmul.mubr.bf16.gmra.mrb[0].mxu0 %v640
        %v961 = vpop.f32.mrb[0].mxu0
        %v962 = vadd.f32 0.0, %v961
        %v963 = vpop.f32.mrb[0].mxu0
        %v964 = vpop.f32.mrb[0].mxu0
        %v965 = vadd.f32 0.0, %v964
        %v966 = vpop.f32.mrb[0].mxu0
        %967 = vmatprep.mubr.bf16.mxu0 0
        %968 = vmatmul.mubr.bf16.gmra.mrb[0].mxu0 %v641
        %v969 = vpop.f32.mrb[0].mxu0
        %v970 = vadd.f32 0.0, %v969
        %v971 = vpop.f32.mrb[0].mxu0
        %v972 = vpop.f32.mrb[0].mxu0
        %v973 = vadd.f32 0.0, %v972
        %v974 = vpop.f32.mrb[0].mxu0
        %975 = vmatprep.mubr.bf16.mxu0 0
        %976 = vmatmul.mubr.bf16.gmra.mrb[0].mxu0 %v642
        %v977 = vpop.f32.mrb[0].mxu0
        %v978 = vadd.f32 0.0, %v977
        %v979 = vpop.f32.mrb[0].mxu0
        %v980 = vpop.f32.mrb[0].mxu0
        %v981 = vadd.f32 0.0, %v980
        %v982 = vpop.f32.mrb[0].mxu0
        %983 = vmatprep.mubr.bf16.mxu0 0
        %984 = vmatmul.mubr.bf16.gmra.mrb[0].mxu0 %v643
        %v985 = vpop.f32.mrb[0].mxu0
        %v986 = vadd.f32 0.0, %v985
        %v987 = vpop.f32.mrb[0].mxu0
        %v988 = vpop.f32.mrb[0].mxu0
        %v989 = vadd.f32 0.0, %v988
        %v990 = vpop.f32.mrb[0].mxu0
        %991 = vmatprep.mubr.bf16.mxu0 0
        %992 = vmatmul.mubr.bf16.gmra.mrb[0].mxu0 %v644
        %v993 = vpop.f32.mrb[0].mxu0
        %v994 = vadd.f32 0.0, %v993
        %v995 = vpop.f32.mrb[0].mxu0
        %v996 = vpop.f32.mrb[0].mxu0
        %v997 = vadd.f32 0.0, %v996
        %v998 = vpop.f32.mrb[0].mxu0
        %999 = vmatprep.mubr.bf16.mxu0 0
        %1000 = vmatmul.mubr.bf16.gmra.mrb[0].mxu0 %v645
        %v1001 = vpop.f32.mrb[0].mxu0
        %v1002 = vadd.f32 0.0, %v1001
        %v1003 = vpop.f32.mrb[0].mxu0
        %v1004 = vpop.f32.mrb[0].mxu0
        %v1005 = vadd.f32 0.0, %v1004
        %v1006 = vpop.f32.mrb[0].mxu0
        %1007 = vmatprep.mubr.bf16.mxu0 0
        %1008 = vmatmul.mubr.bf16.gmra.mrb[0].mxu0 %v646
        %v1009 = vpop.f32.mrb[0].mxu0
        %v1010 = vadd.f32 0.0, %v1009
        %v1011 = vpop.f32.mrb[0].mxu0
        %v1012 = vpop.f32.mrb[0].mxu0
        %v1013 = vadd.f32 0.0, %v1012
        %v1014 = vpop.f32.mrb[0].mxu0
        %1015 = vdwg.mxu0
        %v1016 = vpack.c.bf16 %v765, %v762
        %v1017 = vpack.c.bf16 %v773, %v770
        %v1018 = vpack.c.bf16 %v781, %v778
        %v1019 = vpack.c.bf16 %v789, %v786
        %v1020 = vpack.c.bf16 %v797, %v794
        %v1021 = vpack.c.bf16 %v805, %v802
        %v1022 = vpack.c.bf16 %v813, %v810
        %v1023 = vpack.c.bf16 %v821, %v818
        %v1024 = vpack.c.bf16 %v829, %v826
        %v1025 = vpack.c.bf16 %v837, %v834
        %v1026 = vpack.c.bf16 %v845, %v842
        %v1027 = vpack.c.bf16 %v853, %v850
        %v1028 = vpack.c.bf16 %v861, %v858
        %v1029 = vpack.c.bf16 %v869, %v866
        %v1030 = vpack.c.bf16 %v877, %v874
        %v1031 = vpack.c.bf16 %v885, %v882
        %v1032 = vpack.c.bf16 %v893, %v890
        %v1033 = vpack.c.bf16 %v901, %v898
        %v1034 = vpack.c.bf16 %v909, %v906
        %v1035 = vpack.c.bf16 %v917, %v914
        %v1036 = vpack.c.bf16 %v925, %v922
        %v1037 = vpack.c.bf16 %v933, %v930
        %v1038 = vpack.c.bf16 %v941, %v938
        %v1039 = vpack.c.bf16 %v949, %v946
        %v1040 = vpack.c.bf16 %v957, %v954
        %v1041 = vpack.c.bf16 %v965, %v962
        %v1042 = vpack.c.bf16 %v973, %v970
        %v1043 = vpack.c.bf16 %v981, %v978
        %v1044 = vpack.c.bf16 %v989, %v986
        %v1045 = vpack.c.bf16 %v997, %v994
        %v1046 = vpack.c.bf16 %v1005, %v1002
        %v1047 = vpack.c.bf16 %v1013, %v1010
        %v1048 = vld [vmem:[#allocation2] sm:$0xff]
        %v1049 = vld [vmem:[#allocation2 + $0x8] sm:$0xff]
        %v1050 = vld [vmem:[#allocation2 + $0x10] sm:$0xff]
        %v1051 = vld [vmem:[#allocation2 + $0x18] sm:$0xff]
        %v1052 = vld [vmem:[#allocation2 + $0x20] sm:$0xff]
        %v1053 = vld [vmem:[#allocation2 + $0x28] sm:$0xff]
        %v1054 = vld [vmem:[#allocation2 + $0x30] sm:$0xff]
        %v1055 = vld [vmem:[#allocation2 + $0x38] sm:$0xff]
        %v1056 = vld [vmem:[#allocation2 + $0x40] sm:$0xff]
        %v1057 = vld [vmem:[#allocation2 + $0x48] sm:$0xff]
        %v1058 = vld [vmem:[#allocation2 + $0x50] sm:$0xff]
        %v1059 = vld [vmem:[#allocation2 + $0x58] sm:$0xff]
        %v1060 = vld [vmem:[#allocation2 + $0x60] sm:$0xff]
        %v1061 = vld [vmem:[#allocation2 + $0x68] sm:$0xff]
        %v1062 = vld [vmem:[#allocation2 + $0x70] sm:$0xff]
        %v1063 = vld [vmem:[#allocation2 + $0x78] sm:$0xff]
        %v1064 = vld [vmem:[#allocation2 + $0x80] sm:$0xff]
        %v1065 = vld [vmem:[#allocation2 + $0x88] sm:$0xff]
        %v1066 = vld [vmem:[#allocation2 + $0x90] sm:$0xff]
        %v1067 = vld [vmem:[#allocation2 + $0x98] sm:$0xff]
        %v1068 = vld [vmem:[#allocation2 + $0xa0] sm:$0xff]
        %v1069 = vld [vmem:[#allocation2 + $0xa8] sm:$0xff]
        %v1070 = vld [vmem:[#allocation2 + $0xb0] sm:$0xff]
        %v1071 = vld [vmem:[#allocation2 + $0xb8] sm:$0xff]
        %v1072 = vld [vmem:[#allocation2 + $0xc0] sm:$0xff]
        %v1073 = vld [vmem:[#allocation2 + $0xc8] sm:$0xff]
        %v1074 = vld [vmem:[#allocation2 + $0xd0] sm:$0xff]
        %v1075 = vld [vmem:[#allocation2 + $0xd8] sm:$0xff]
        %v1076 = vld [vmem:[#allocation2 + $0xe0] sm:$0xff]
        %v1077 = vld [vmem:[#allocation2 + $0xe8] sm:$0xff]
        %v1078 = vld [vmem:[#allocation2 + $0xf0] sm:$0xff]
        %v1079 = vld [vmem:[#allocation2 + $0xf8] sm:$0xff]
        %v1080 = vld [vmem:[%s316] sm:$0xff]
        %v1081 = vld [vmem:[%s316 + $0x8] sm:$0xff]
        %v1082 = vld [vmem:[%s316 + $0x10] sm:$0xff]
        %v1083 = vld [vmem:[%s316 + $0x18] sm:$0xff]
        %v1084 = vld [vmem:[%s316 + $0x20] sm:$0xff]
        %v1085 = vld [vmem:[%s316 + $0x28] sm:$0xff]
        %v1086 = vld [vmem:[%s316 + $0x30] sm:$0xff]
        %v1087 = vld [vmem:[%s316 + $0x38] sm:$0xff]
        %v1088 = vld [vmem:[%s316 + $0x40] sm:$0xff]
        %v1089 = vld [vmem:[%s316 + $0x48] sm:$0xff]
        %v1090 = vld [vmem:[%s316 + $0x50] sm:$0xff]
        %v1091 = vld [vmem:[%s316 + $0x58] sm:$0xff]
        %v1092 = vld [vmem:[%s316 + $0x60] sm:$0xff]
        %v1093 = vld [vmem:[%s316 + $0x68] sm:$0xff]
        %v1094 = vld [vmem:[%s316 + $0x70] sm:$0xff]
        %v1095 = vld [vmem:[%s316 + $0x78] sm:$0xff]
        %v1096 = vld [vmem:[%s316 + $0x80] sm:$0xff]
        %v1097 = vld [vmem:[%s316 + $0x88] sm:$0xff]
        %v1098 = vld [vmem:[%s316 + $0x90] sm:$0xff]
        %v1099 = vld [vmem:[%s316 + $0x98] sm:$0xff]
        %v1100 = vld [vmem:[%s316 + $0xa0] sm:$0xff]
        %v1101 = vld [vmem:[%s316 + $0xa8] sm:$0xff]
        %v1102 = vld [vmem:[%s316 + $0xb0] sm:$0xff]
        %v1103 = vld [vmem:[%s316 + $0xb8] sm:$0xff]
        %v1104 = vld [vmem:[%s316 + $0xc0] sm:$0xff]
        %v1105 = vld [vmem:[%s316 + $0xc8] sm:$0xff]
        %v1106 = vld [vmem:[%s316 + $0xd0] sm:$0xff]
        %v1107 = vld [vmem:[%s316 + $0xd8] sm:$0xff]
        %v1108 = vld [vmem:[%s316 + $0xe0] sm:$0xff]
        %v1109 = vld [vmem:[%s316 + $0xe8] sm:$0xff]
        %v1110 = vld [vmem:[%s316 + $0xf0] sm:$0xff]
        %v1111 = vld [vmem:[%s316 + $0xf8] sm:$0xff]
        %v1112 = vld [vmem:[%s316 + $0x100] sm:$0xff]
        %v1113 = vld [vmem:[%s316 + $0x108] sm:$0xff]
        %v1114 = vld [vmem:[%s316 + $0x110] sm:$0xff]
        %v1115 = vld [vmem:[%s316 + $0x118] sm:$0xff]
        %v1116 = vld [vmem:[%s316 + $0x120] sm:$0xff]
        %v1117 = vld [vmem:[%s316 + $0x128] sm:$0xff]
        %v1118 = vld [vmem:[%s316 + $0x130] sm:$0xff]
        %v1119 = vld [vmem:[%s316 + $0x138] sm:$0xff]
        %v1120 = vld [vmem:[%s316 + $0x140] sm:$0xff]
        %v1121 = vld [vmem:[%s316 + $0x148] sm:$0xff]
        %v1122 = vld [vmem:[%s316 + $0x150] sm:$0xff]
        %v1123 = vld [vmem:[%s316 + $0x158] sm:$0xff]
        %v1124 = vld [vmem:[%s316 + $0x160] sm:$0xff]
        %v1125 = vld [vmem:[%s316 + $0x168] sm:$0xff]
        %v1126 = vld [vmem:[%s316 + $0x170] sm:$0xff]
        %v1127 = vld [vmem:[%s316 + $0x178] sm:$0xff]
        %v1128 = vld [vmem:[%s316 + $0x180] sm:$0xff]
        %v1129 = vld [vmem:[%s316 + $0x188] sm:$0xff]
        %v1130 = vld [vmem:[%s316 + $0x190] sm:$0xff]
        %v1131 = vld [vmem:[%s316 + $0x198] sm:$0xff]
        %v1132 = vld [vmem:[%s316 + $0x1a0] sm:$0xff]
        %v1133 = vld [vmem:[%s316 + $0x1a8] sm:$0xff]
        %v1134 = vld [vmem:[%s316 + $0x1b0] sm:$0xff]
        %v1135 = vld [vmem:[%s316 + $0x1b8] sm:$0xff]
        %v1136 = vld [vmem:[%s316 + $0x1c0] sm:$0xff]
        %v1137 = vld [vmem:[%s316 + $0x1c8] sm:$0xff]
        %v1138 = vld [vmem:[%s316 + $0x1d0] sm:$0xff]
        %v1139 = vld [vmem:[%s316 + $0x1d8] sm:$0xff]
        %v1140 = vld [vmem:[%s316 + $0x1e0] sm:$0xff]
        %v1141 = vld [vmem:[%s316 + $0x1e8] sm:$0xff]
        %v1142 = vld [vmem:[%s316 + $0x1f0] sm:$0xff]
        %v1143 = vld [vmem:[%s316 + $0x1f8] sm:$0xff]
        %v1208 = vunpack.c.l.b16 %v1080
        %v1209 = vunpack.c.h.b16 %v1080
        %v1210 = vunpack.c.l.b16 %v1081
        %v1211 = vunpack.c.h.b16 %v1081
        %v1212 = vunpack.c.l.b16 %v1082
        %v1213 = vunpack.c.h.b16 %v1082
        %v1214 = vunpack.c.l.b16 %v1083
        %v1215 = vunpack.c.h.b16 %v1083
        %v1216 = vunpack.c.l.b16 %v1084
        %v1217 = vunpack.c.h.b16 %v1084
        %v1218 = vunpack.c.l.b16 %v1085
        %v1219 = vunpack.c.h.b16 %v1085
        %v1220 = vunpack.c.l.b16 %v1086
        %v1221 = vunpack.c.h.b16 %v1086
        %v1222 = vunpack.c.l.b16 %v1087
        %v1223 = vunpack.c.h.b16 %v1087
        %v1224 = vunpack.c.l.b16 %v1088
        %v1225 = vunpack.c.h.b16 %v1088
        %v1226 = vunpack.c.l.b16 %v1089
        %v1227 = vunpack.c.h.b16 %v1089
        %v1228 = vunpack.c.l.b16 %v1090
        %v1229 = vunpack.c.h.b16 %v1090
        %v1230 = vunpack.c.l.b16 %v1091
        %v1231 = vunpack.c.h.b16 %v1091
        %v1232 = vunpack.c.l.b16 %v1092
        %v1233 = vunpack.c.h.b16 %v1092
        %v1234 = vunpack.c.l.b16 %v1093
        %v1235 = vunpack.c.h.b16 %v1093
        %v1236 = vunpack.c.l.b16 %v1094
        %v1237 = vunpack.c.h.b16 %v1094
        %v1238 = vunpack.c.l.b16 %v1095
        %v1239 = vunpack.c.h.b16 %v1095
        %v1240 = vunpack.c.l.b16 %v1096
        %v1241 = vunpack.c.h.b16 %v1096
        %v1242 = vunpack.c.l.b16 %v1097
        %v1243 = vunpack.c.h.b16 %v1097
        %v1244 = vunpack.c.l.b16 %v1098
        %v1245 = vunpack.c.h.b16 %v1098
        %v1246 = vunpack.c.l.b16 %v1099
        %v1247 = vunpack.c.h.b16 %v1099
        %v1248 = vunpack.c.l.b16 %v1100
        %v1249 = vunpack.c.h.b16 %v1100
        %v1250 = vunpack.c.l.b16 %v1101
        %v1251 = vunpack.c.h.b16 %v1101
        %v1252 = vunpack.c.l.b16 %v1102
        %v1253 = vunpack.c.h.b16 %v1102
        %v1254 = vunpack.c.l.b16 %v1103
        %v1255 = vunpack.c.h.b16 %v1103
        %v1256 = vunpack.c.l.b16 %v1104
        %v1257 = vunpack.c.h.b16 %v1104
        %v1258 = vunpack.c.l.b16 %v1105
        %v1259 = vunpack.c.h.b16 %v1105
        %v1260 = vunpack.c.l.b16 %v1106
        %v1261 = vunpack.c.h.b16 %v1106
        %v1262 = vunpack.c.l.b16 %v1107
        %v1263 = vunpack.c.h.b16 %v1107
        %v1264 = vunpack.c.l.b16 %v1108
        %v1265 = vunpack.c.h.b16 %v1108
        %v1266 = vunpack.c.l.b16 %v1109
        %v1267 = vunpack.c.h.b16 %v1109
        %v1268 = vunpack.c.l.b16 %v1110
        %v1269 = vunpack.c.h.b16 %v1110
        %v1270 = vunpack.c.l.b16 %v1111
        %v1271 = vunpack.c.h.b16 %v1111
        %v1272 = vunpack.c.l.b16 %v1112
        %v1273 = vunpack.c.h.b16 %v1112
        %v1274 = vunpack.c.l.b16 %v1113
        %v1275 = vunpack.c.h.b16 %v1113
        %v1276 = vunpack.c.l.b16 %v1114
        %v1277 = vunpack.c.h.b16 %v1114
        %v1278 = vunpack.c.l.b16 %v1115
        %v1279 = vunpack.c.h.b16 %v1115
        %v1280 = vunpack.c.l.b16 %v1116
        %v1281 = vunpack.c.h.b16 %v1116
        %v1282 = vunpack.c.l.b16 %v1117
        %v1283 = vunpack.c.h.b16 %v1117
        %v1284 = vunpack.c.l.b16 %v1118
        %v1285 = vunpack.c.h.b16 %v1118
        %v1286 = vunpack.c.l.b16 %v1119
        %v1287 = vunpack.c.h.b16 %v1119
        %v1288 = vunpack.c.l.b16 %v1120
        %v1289 = vunpack.c.h.b16 %v1120
        %v1290 = vunpack.c.l.b16 %v1121
        %v1291 = vunpack.c.h.b16 %v1121
        %v1292 = vunpack.c.l.b16 %v1122
        %v1293 = vunpack.c.h.b16 %v1122
        %v1294 = vunpack.c.l.b16 %v1123
        %v1295 = vunpack.c.h.b16 %v1123
        %v1296 = vunpack.c.l.b16 %v1124
        %v1297 = vunpack.c.h.b16 %v1124
        %v1298 = vunpack.c.l.b16 %v1125
        %v1299 = vunpack.c.h.b16 %v1125
        %v1300 = vunpack.c.l.b16 %v1126
        %v1301 = vunpack.c.h.b16 %v1126
        %v1302 = vunpack.c.l.b16 %v1127
        %v1303 = vunpack.c.h.b16 %v1127
        %v1304 = vunpack.c.l.b16 %v1128
        %v1305 = vunpack.c.h.b16 %v1128
        %v1306 = vunpack.c.l.b16 %v1129
        %v1307 = vunpack.c.h.b16 %v1129
        %v1308 = vunpack.c.l.b16 %v1130
        %v1309 = vunpack.c.h.b16 %v1130
        %v1310 = vunpack.c.l.b16 %v1131
        %v1311 = vunpack.c.h.b16 %v1131
        %v1312 = vunpack.c.l.b16 %v1132
        %v1313 = vunpack.c.h.b16 %v1132
        %v1314 = vunpack.c.l.b16 %v1133
        %v1315 = vunpack.c.h.b16 %v1133
        %v1316 = vunpack.c.l.b16 %v1134
        %v1317 = vunpack.c.h.b16 %v1134
        %v1318 = vunpack.c.l.b16 %v1135
        %v1319 = vunpack.c.h.b16 %v1135
        %v1320 = vunpack.c.l.b16 %v1136
        %v1321 = vunpack.c.h.b16 %v1136
        %v1322 = vunpack.c.l.b16 %v1137
        %v1323 = vunpack.c.h.b16 %v1137
        %v1324 = vunpack.c.l.b16 %v1138
        %v1325 = vunpack.c.h.b16 %v1138
        %v1326 = vunpack.c.l.b16 %v1139
        %v1327 = vunpack.c.h.b16 %v1139
        %v1328 = vunpack.c.l.b16 %v1140
        %v1329 = vunpack.c.h.b16 %v1140
        %v1330 = vunpack.c.l.b16 %v1141
        %v1331 = vunpack.c.h.b16 %v1141
        %v1332 = vunpack.c.l.b16 %v1142
        %v1333 = vunpack.c.h.b16 %v1142
        %v1334 = vunpack.c.l.b16 %v1143
        %v1335 = vunpack.c.h.b16 %v1143
        %v1336 = vpack.c.b16 %v1212, %v1208
        %v1337 = vpack.c.b16 %v1213, %v1209
        %v1338 = vpack.c.b16 %v1214, %v1210
        %v1339 = vpack.c.b16 %v1215, %v1211
        %v1340 = vpack.c.b16 %v1220, %v1216
        %v1341 = vpack.c.b16 %v1221, %v1217
        %v1342 = vpack.c.b16 %v1222, %v1218
        %v1343 = vpack.c.b16 %v1223, %v1219
        %v1344 = vpack.c.b16 %v1228, %v1224
        %v1345 = vpack.c.b16 %v1229, %v1225
        %v1346 = vpack.c.b16 %v1230, %v1226
        %v1347 = vpack.c.b16 %v1231, %v1227
        %v1348 = vpack.c.b16 %v1236, %v1232
        %v1349 = vpack.c.b16 %v1237, %v1233
        %v1350 = vpack.c.b16 %v1238, %v1234
        %v1351 = vpack.c.b16 %v1239, %v1235
        %v1352 = vpack.c.b16 %v1244, %v1240
        %v1353 = vpack.c.b16 %v1245, %v1241
        %v1354 = vpack.c.b16 %v1246, %v1242
        %v1355 = vpack.c.b16 %v1247, %v1243
        %v1356 = vpack.c.b16 %v1252, %v1248
        %v1357 = vpack.c.b16 %v1253, %v1249
        %v1358 = vpack.c.b16 %v1254, %v1250
        %v1359 = vpack.c.b16 %v1255, %v1251
        %v1360 = vpack.c.b16 %v1260, %v1256
        %v1361 = vpack.c.b16 %v1261, %v1257
        %v1362 = vpack.c.b16 %v1262, %v1258
        %v1363 = vpack.c.b16 %v1263, %v1259
        %v1364 = vpack.c.b16 %v1268, %v1264
        %v1365 = vpack.c.b16 %v1269, %v1265
        %v1366 = vpack.c.b16 %v1270, %v1266
        %v1367 = vpack.c.b16 %v1271, %v1267
        %v1368 = vpack.c.b16 %v1276, %v1272
        %v1369 = vpack.c.b16 %v1277, %v1273
        %v1370 = vpack.c.b16 %v1278, %v1274
        %v1371 = vpack.c.b16 %v1279, %v1275
        %v1372 = vpack.c.b16 %v1284, %v1280
        %v1373 = vpack.c.b16 %v1285, %v1281
        %v1374 = vpack.c.b16 %v1286, %v1282
        %v1375 = vpack.c.b16 %v1287, %v1283
        %v1376 = vpack.c.b16 %v1292, %v1288
        %v1377 = vpack.c.b16 %v1293, %v1289
        %v1378 = vpack.c.b16 %v1294, %v1290
        %v1379 = vpack.c.b16 %v1295, %v1291
        %v1380 = vpack.c.b16 %v1300, %v1296
        %v1381 = vpack.c.b16 %v1301, %v1297
        %v1382 = vpack.c.b16 %v1302, %v1298
        %v1383 = vpack.c.b16 %v1303, %v1299
        %v1384 = vpack.c.b16 %v1308, %v1304
        %v1385 = vpack.c.b16 %v1309, %v1305
        %v1386 = vpack.c.b16 %v1310, %v1306
        %v1387 = vpack.c.b16 %v1311, %v1307
        %v1388 = vpack.c.b16 %v1316, %v1312
        %v1389 = vpack.c.b16 %v1317, %v1313
        %v1390 = vpack.c.b16 %v1318, %v1314
        %v1391 = vpack.c.b16 %v1319, %v1315
        %v1392 = vpack.c.b16 %v1324, %v1320
        %v1393 = vpack.c.b16 %v1325, %v1321
        %v1394 = vpack.c.b16 %v1326, %v1322
        %v1395 = vpack.c.b16 %v1327, %v1323
        %v1396 = vpack.c.b16 %v1332, %v1328
        %v1397 = vpack.c.b16 %v1333, %v1329
        %v1398 = vpack.c.b16 %v1334, %v1330
        %v1399 = vpack.c.b16 %v1335, %v1331
        %1464 = vmatprep.subr.bf16.mxu0 0
        %1465 = vmatpush1.bf16.msra.mxu0 %v1016
        %1466 = vmatprep.subr.bf16.mxu0 0
        %1467 = vmatpush1.bf16.msra.mxu0 %v1017
        %1468 = vmatprep.subr.bf16.mxu0 0
        %1469 = vmatpush1.bf16.msra.mxu0 %v1018
        %1470 = vmatprep.subr.bf16.mxu0 0
        %1471 = vmatpush1.bf16.msra.mxu0 %v1019
        %1472 = vmatprep.subr.bf16.mxu0 0
        %1473 = vmatpush1.bf16.msra.mxu0 %v1020
        %1474 = vmatprep.subr.bf16.mxu0 0
        %1475 = vmatpush1.bf16.msra.mxu0 %v1021
        %1476 = vmatprep.subr.bf16.mxu0 0
        %1477 = vmatpush1.bf16.msra.mxu0 %v1022
        %1478 = vmatprep.subr.bf16.mxu0 0
        %1479 = vmatpush1.bf16.msra.mxu0 %v1023
        %1480 = vmatprep.subr.bf16.mxu0 0
        %1481 = vmatpush1.bf16.msra.mxu0 %v1024
        %1482 = vmatprep.subr.bf16.mxu0 0
        %1483 = vmatpush1.bf16.msra.mxu0 %v1025
        %1484 = vmatprep.subr.bf16.mxu0 0
        %1485 = vmatpush1.bf16.msra.mxu0 %v1026
        %1486 = vmatprep.subr.bf16.mxu0 0
        %1487 = vmatpush1.bf16.msra.mxu0 %v1027
        %1488 = vmatprep.subr.bf16.mxu0 0
        %1489 = vmatpush1.bf16.msra.mxu0 %v1028
        %1490 = vmatprep.subr.bf16.mxu0 0
        %1491 = vmatpush1.bf16.msra.mxu0 %v1029
        %1492 = vmatprep.subr.bf16.mxu0 0
        %1493 = vmatpush1.bf16.msra.mxu0 %v1030
        %1494 = vmatprep.subr.bf16.mxu0 0
        %1495 = vmatpush1.bf16.msra.mxu0 %v1031
        %1496 = vmatprep.mubr.bf16.mxu0 %v1337
        %1497 = vmatmul.mubr.bf16.gmra.mrb[0].mxu0 %v1336
        %v1498 = vpop.f32.mrb[0].mxu0
        %v1499 = vadd.f32 0.0, %v1498
        %v1500 = vpop.f32.mrb[0].mxu0
        %v1501 = vpop.f32.mrb[0].mxu0
        %v1502 = vadd.f32 0.0, %v1501
        %v1503 = vpop.f32.mrb[0].mxu0
        %1504 = vmatprep.mubr.bf16.mxu0 %v1341
        %1505 = vmatmul.mubr.bf16.gmra.mrb[0].mxu0 %v1340
        %v1506 = vpop.f32.mrb[0].mxu0
        %v1507 = vadd.f32 0.0, %v1506
        %v1508 = vpop.f32.mrb[0].mxu0
        %v1509 = vpop.f32.mrb[0].mxu0
        %v1510 = vadd.f32 0.0, %v1509
        %v1511 = vpop.f32.mrb[0].mxu0
        %1512 = vmatprep.mubr.bf16.mxu0 %v1345
        %1513 = vmatmul.mubr.bf16.gmra.mrb[0].mxu0 %v1344
        %v1514 = vpop.f32.mrb[0].mxu0
        %v1515 = vadd.f32 0.0, %v1514
        %v1516 = vpop.f32.mrb[0].mxu0
        %v1517 = vpop.f32.mrb[0].mxu0
        %v1518 = vadd.f32 0.0, %v1517
        %v1519 = vpop.f32.mrb[0].mxu0
        %1520 = vmatprep.mubr.bf16.mxu0 %v1349
        %1521 = vmatmul.mubr.bf16.gmra.mrb[0].mxu0 %v1348
        %v1522 = vpop.f32.mrb[0].mxu0
        %v1523 = vadd.f32 0.0, %v1522
        %v1524 = vpop.f32.mrb[0].mxu0
        %v1525 = vpop.f32.mrb[0].mxu0
        %v1526 = vadd.f32 0.0, %v1525
        %v1527 = vpop.f32.mrb[0].mxu0
        %1528 = vmatprep.mubr.bf16.mxu0 %v1353
        %1529 = vmatmul.mubr.bf16.gmra.mrb[0].mxu0 %v1352
        %v1530 = vpop.f32.mrb[0].mxu0
        %v1531 = vadd.f32 0.0, %v1530
        %v1532 = vpop.f32.mrb[0].mxu0
        %v1533 = vpop.f32.mrb[0].mxu0
        %v1534 = vadd.f32 0.0, %v1533
        %v1535 = vpop.f32.mrb[0].mxu0
        %1536 = vmatprep.mubr.bf16.mxu0 %v1357
        %1537 = vmatmul.mubr.bf16.gmra.mrb[0].mxu0 %v1356
        %v1538 = vpop.f32.mrb[0].mxu0
        %v1539 = vadd.f32 0.0, %v1538
        %v1540 = vpop.f32.mrb[0].mxu0
        %v1541 = vpop.f32.mrb[0].mxu0
        %v1542 = vadd.f32 0.0, %v1541
        %v1543 = vpop.f32.mrb[0].mxu0
        %1544 = vmatprep.mubr.bf16.mxu0 %v1361
        %1545 = vmatmul.mubr.bf16.gmra.mrb[0].mxu0 %v1360
        %v1546 = vpop.f32.mrb[0].mxu0
        %v1547 = vadd.f32 0.0, %v1546
        %v1548 = vpop.f32.mrb[0].mxu0
        %v1549 = vpop.f32.mrb[0].mxu0
        %v1550 = vadd.f32 0.0, %v1549
        %v1551 = vpop.f32.mrb[0].mxu0
        %1552 = vmatprep.mubr.bf16.mxu0 %v1365
        %1553 = vmatmul.mubr.bf16.gmra.mrb[0].mxu0 %v1364
        %v1554 = vpop.f32.mrb[0].mxu0
        %v1555 = vadd.f32 0.0, %v1554
        %v1556 = vpop.f32.mrb[0].mxu0
        %v1557 = vpop.f32.mrb[0].mxu0
        %v1558 = vadd.f32 0.0, %v1557
        %v1559 = vpop.f32.mrb[0].mxu0
        %1560 = vmatprep.mubr.bf16.mxu0 %v1369
        %1561 = vmatmul.mubr.bf16.gmra.mrb[0].mxu0 %v1368
        %v1562 = vpop.f32.mrb[0].mxu0
        %v1563 = vadd.f32 0.0, %v1562
        %v1564 = vpop.f32.mrb[0].mxu0
        %v1565 = vpop.f32.mrb[0].mxu0
        %v1566 = vadd.f32 0.0, %v1565
        %v1567 = vpop.f32.mrb[0].mxu0
        %1568 = vmatprep.mubr.bf16.mxu0 %v1373
        %1569 = vmatmul.mubr.bf16.gmra.mrb[0].mxu0 %v1372
        %v1570 = vpop.f32.mrb[0].mxu0
        %v1571 = vadd.f32 0.0, %v1570
        %v1572 = vpop.f32.mrb[0].mxu0
        %v1573 = vpop.f32.mrb[0].mxu0
        %v1574 = vadd.f32 0.0, %v1573
        %v1575 = vpop.f32.mrb[0].mxu0
        %1576 = vmatprep.mubr.bf16.mxu0 %v1377
        %1577 = vmatmul.mubr.bf16.gmra.mrb[0].mxu0 %v1376
        %v1578 = vpop.f32.mrb[0].mxu0
        %v1579 = vadd.f32 0.0, %v1578
        %v1580 = vpop.f32.mrb[0].mxu0
        %v1581 = vpop.f32.mrb[0].mxu0
        %v1582 = vadd.f32 0.0, %v1581
        %v1583 = vpop.f32.mrb[0].mxu0
        %1584 = vmatprep.mubr.bf16.mxu0 %v1381
        %1585 = vmatmul.mubr.bf16.gmra.mrb[0].mxu0 %v1380
        %v1586 = vpop.f32.mrb[0].mxu0
        %v1587 = vadd.f32 0.0, %v1586
        %v1588 = vpop.f32.mrb[0].mxu0
        %v1589 = vpop.f32.mrb[0].mxu0
        %v1590 = vadd.f32 0.0, %v1589
        %v1591 = vpop.f32.mrb[0].mxu0
        %1592 = vmatprep.mubr.bf16.mxu0 %v1385
        %1593 = vmatmul.mubr.bf16.gmra.mrb[0].mxu0 %v1384
        %v1594 = vpop.f32.mrb[0].mxu0
        %v1595 = vadd.f32 0.0, %v1594
        %v1596 = vpop.f32.mrb[0].mxu0
        %v1597 = vpop.f32.mrb[0].mxu0
        %v1598 = vadd.f32 0.0, %v1597
        %v1599 = vpop.f32.mrb[0].mxu0
        %1600 = vmatprep.mubr.bf16.mxu0 %v1389
        %1601 = vmatmul.mubr.bf16.gmra.mrb[0].mxu0 %v1388
        %v1602 = vpop.f32.mrb[0].mxu0
        %v1603 = vadd.f32 0.0, %v1602
        %v1604 = vpop.f32.mrb[0].mxu0
        %v1605 = vpop.f32.mrb[0].mxu0
        %v1606 = vadd.f32 0.0, %v1605
        %v1607 = vpop.f32.mrb[0].mxu0
        %1608 = vmatprep.mubr.bf16.mxu0 %v1393
        %1609 = vmatmul.mubr.bf16.gmra.mrb[0].mxu0 %v1392
        %v1610 = vpop.f32.mrb[0].mxu0
        %v1611 = vadd.f32 0.0, %v1610
        %v1612 = vpop.f32.mrb[0].mxu0
        %v1613 = vpop.f32.mrb[0].mxu0
        %v1614 = vadd.f32 0.0, %v1613
        %v1615 = vpop.f32.mrb[0].mxu0
        %1616 = vmatprep.mubr.bf16.mxu0 %v1397
        %1617 = vmatmul.mubr.bf16.gmra.mrb[0].mxu0 %v1396
        %v1618 = vpop.f32.mrb[0].mxu0
        %v1619 = vadd.f32 0.0, %v1618
        %v1620 = vpop.f32.mrb[0].mxu0
        %v1621 = vpop.f32.mrb[0].mxu0
        %v1622 = vadd.f32 0.0, %v1621
        %v1623 = vpop.f32.mrb[0].mxu0
        %1624 = vdwg.mxu0
        %1625 = vmatprep.subr.bf16.mxu0 0
        %1626 = vmatpush1.bf16.msra.mxu0 %v1032
        %1627 = vmatprep.subr.bf16.mxu0 0
        %1628 = vmatpush1.bf16.msra.mxu0 %v1033
        %1629 = vmatprep.subr.bf16.mxu0 0
        %1630 = vmatpush1.bf16.msra.mxu0 %v1034
        %1631 = vmatprep.subr.bf16.mxu0 0
        %1632 = vmatpush1.bf16.msra.mxu0 %v1035
        %1633 = vmatprep.subr.bf16.mxu0 0
        %1634 = vmatpush1.bf16.msra.mxu0 %v1036
        %1635 = vmatprep.subr.bf16.mxu0 0
        %1636 = vmatpush1.bf16.msra.mxu0 %v1037
        %1637 = vmatprep.subr.bf16.mxu0 0
        %1638 = vmatpush1.bf16.msra.mxu0 %v1038
        %1639 = vmatprep.subr.bf16.mxu0 0
        %1640 = vmatpush1.bf16.msra.mxu0 %v1039
        %1641 = vmatprep.subr.bf16.mxu0 0
        %1642 = vmatpush1.bf16.msra.mxu0 %v1040
        %1643 = vmatprep.subr.bf16.mxu0 0
        %1644 = vmatpush1.bf16.msra.mxu0 %v1041
        %1645 = vmatprep.subr.bf16.mxu0 0
        %1646 = vmatpush1.bf16.msra.mxu0 %v1042
        %1647 = vmatprep.subr.bf16.mxu0 0
        %1648 = vmatpush1.bf16.msra.mxu0 %v1043
        %1649 = vmatprep.subr.bf16.mxu0 0
        %1650 = vmatpush1.bf16.msra.mxu0 %v1044
        %1651 = vmatprep.subr.bf16.mxu0 0
        %1652 = vmatpush1.bf16.msra.mxu0 %v1045
        %1653 = vmatprep.subr.bf16.mxu0 0
        %1654 = vmatpush1.bf16.msra.mxu0 %v1046
        %1655 = vmatprep.subr.bf16.mxu0 0
        %1656 = vmatpush1.bf16.msra.mxu0 %v1047
        %1657 = vmatprep.mubr.bf16.mxu0 %v1339
        %1658 = vmatmul.mubr.bf16.gmra.mrb[0].mxu0 %v1338
        %v1659 = vpop.f32.mrb[0].mxu0
        %v1660 = vadd.f32 %v1499, %v1659
        %v1661 = vpop.f32.mrb[0].mxu0
        %v1662 = vpop.f32.mrb[0].mxu0
        %v1663 = vadd.f32 %v1502, %v1662
        %v1664 = vpop.f32.mrb[0].mxu0
        %1665 = vmatprep.mubr.bf16.mxu0 %v1343
        %1666 = vmatmul.mubr.bf16.gmra.mrb[0].mxu0 %v1342
        %v1667 = vpop.f32.mrb[0].mxu0
        %v1668 = vadd.f32 %v1507, %v1667
        %v1669 = vpop.f32.mrb[0].mxu0
        %v1670 = vpop.f32.mrb[0].mxu0
        %v1671 = vadd.f32 %v1510, %v1670
        %v1672 = vpop.f32.mrb[0].mxu0
        %1673 = vmatprep.mubr.bf16.mxu0 %v1347
        %1674 = vmatmul.mubr.bf16.gmra.mrb[0].mxu0 %v1346
        %v1675 = vpop.f32.mrb[0].mxu0
        %v1676 = vadd.f32 %v1515, %v1675
        %v1677 = vpop.f32.mrb[0].mxu0
        %v1678 = vpop.f32.mrb[0].mxu0
        %v1679 = vadd.f32 %v1518, %v1678
        %v1680 = vpop.f32.mrb[0].mxu0
        %1681 = vmatprep.mubr.bf16.mxu0 %v1351
        %1682 = vmatmul.mubr.bf16.gmra.mrb[0].mxu0 %v1350
        %v1683 = vpop.f32.mrb[0].mxu0
        %v1684 = vadd.f32 %v1523, %v1683
        %v1685 = vpop.f32.mrb[0].mxu0
        %v1686 = vpop.f32.mrb[0].mxu0
        %v1687 = vadd.f32 %v1526, %v1686
        %v1688 = vpop.f32.mrb[0].mxu0
        %1689 = vmatprep.mubr.bf16.mxu0 %v1355
        %1690 = vmatmul.mubr.bf16.gmra.mrb[0].mxu0 %v1354
        %v1691 = vpop.f32.mrb[0].mxu0
        %v1692 = vadd.f32 %v1531, %v1691
        %v1693 = vpop.f32.mrb[0].mxu0
        %v1694 = vpop.f32.mrb[0].mxu0
        %v1695 = vadd.f32 %v1534, %v1694
        %v1696 = vpop.f32.mrb[0].mxu0
        %1697 = vmatprep.mubr.bf16.mxu0 %v1359
        %1698 = vmatmul.mubr.bf16.gmra.mrb[0].mxu0 %v1358
        %v1699 = vpop.f32.mrb[0].mxu0
        %v1700 = vadd.f32 %v1539, %v1699
        %v1701 = vpop.f32.mrb[0].mxu0
        %v1702 = vpop.f32.mrb[0].mxu0
        %v1703 = vadd.f32 %v1542, %v1702
        %v1704 = vpop.f32.mrb[0].mxu0
        %1705 = vmatprep.mubr.bf16.mxu0 %v1363
        %1706 = vmatmul.mubr.bf16.gmra.mrb[0].mxu0 %v1362
        %v1707 = vpop.f32.mrb[0].mxu0
        %v1708 = vadd.f32 %v1547, %v1707
        %v1709 = vpop.f32.mrb[0].mxu0
        %v1710 = vpop.f32.mrb[0].mxu0
        %v1711 = vadd.f32 %v1550, %v1710
        %v1712 = vpop.f32.mrb[0].mxu0
        %1713 = vmatprep.mubr.bf16.mxu0 %v1367
        %1714 = vmatmul.mubr.bf16.gmra.mrb[0].mxu0 %v1366
        %v1715 = vpop.f32.mrb[0].mxu0
        %v1716 = vadd.f32 %v1555, %v1715
        %v1717 = vpop.f32.mrb[0].mxu0
        %v1718 = vpop.f32.mrb[0].mxu0
        %v1719 = vadd.f32 %v1558, %v1718
        %v1720 = vpop.f32.mrb[0].mxu0
        %1721 = vmatprep.mubr.bf16.mxu0 %v1371
        %1722 = vmatmul.mubr.bf16.gmra.mrb[0].mxu0 %v1370
        %v1723 = vpop.f32.mrb[0].mxu0
        %v1724 = vadd.f32 %v1563, %v1723
        %v1725 = vpop.f32.mrb[0].mxu0
        %v1726 = vpop.f32.mrb[0].mxu0
        %v1727 = vadd.f32 %v1566, %v1726
        %v1728 = vpop.f32.mrb[0].mxu0
        %1729 = vmatprep.mubr.bf16.mxu0 %v1375
        %1730 = vmatmul.mubr.bf16.gmra.mrb[0].mxu0 %v1374
        %v1731 = vpop.f32.mrb[0].mxu0
        %v1732 = vadd.f32 %v1571, %v1731
        %v1733 = vpop.f32.mrb[0].mxu0
        %v1734 = vpop.f32.mrb[0].mxu0
        %v1735 = vadd.f32 %v1574, %v1734
        %v1736 = vpop.f32.mrb[0].mxu0
        %1737 = vmatprep.mubr.bf16.mxu0 %v1379
        %1738 = vmatmul.mubr.bf16.gmra.mrb[0].mxu0 %v1378
        %v1739 = vpop.f32.mrb[0].mxu0
        %v1740 = vadd.f32 %v1579, %v1739
        %v1741 = vpop.f32.mrb[0].mxu0
        %v1742 = vpop.f32.mrb[0].mxu0
        %v1743 = vadd.f32 %v1582, %v1742
        %v1744 = vpop.f32.mrb[0].mxu0
        %1745 = vmatprep.mubr.bf16.mxu0 %v1383
        %1746 = vmatmul.mubr.bf16.gmra.mrb[0].mxu0 %v1382
        %v1747 = vpop.f32.mrb[0].mxu0
        %v1748 = vadd.f32 %v1587, %v1747
        %v1749 = vpop.f32.mrb[0].mxu0
        %v1750 = vpop.f32.mrb[0].mxu0
        %v1751 = vadd.f32 %v1590, %v1750
        %v1752 = vpop.f32.mrb[0].mxu0
        %1753 = vmatprep.mubr.bf16.mxu0 %v1387
        %1754 = vmatmul.mubr.bf16.gmra.mrb[0].mxu0 %v1386
        %v1755 = vpop.f32.mrb[0].mxu0
        %v1756 = vadd.f32 %v1595, %v1755
        %v1757 = vpop.f32.mrb[0].mxu0
        %v1758 = vpop.f32.mrb[0].mxu0
        %v1759 = vadd.f32 %v1598, %v1758
        %v1760 = vpop.f32.mrb[0].mxu0
        %1761 = vmatprep.mubr.bf16.mxu0 %v1391
        %1762 = vmatmul.mubr.bf16.gmra.mrb[0].mxu0 %v1390
        %v1763 = vpop.f32.mrb[0].mxu0
        %v1764 = vadd.f32 %v1603, %v1763
        %v1765 = vpop.f32.mrb[0].mxu0
        %v1766 = vpop.f32.mrb[0].mxu0
        %v1767 = vadd.f32 %v1606, %v1766
        %v1768 = vpop.f32.mrb[0].mxu0
        %1769 = vmatprep.mubr.bf16.mxu0 %v1395
        %1770 = vmatmul.mubr.bf16.gmra.mrb[0].mxu0 %v1394
        %v1771 = vpop.f32.mrb[0].mxu0
        %v1772 = vadd.f32 %v1611, %v1771
        %v1773 = vpop.f32.mrb[0].mxu0
        %v1774 = vpop.f32.mrb[0].mxu0
        %v1775 = vadd.f32 %v1614, %v1774
        %v1776 = vpop.f32.mrb[0].mxu0
        %1777 = vmatprep.mubr.bf16.mxu0 %v1399
        %1778 = vmatmul.mubr.bf16.gmra.mrb[0].mxu0 %v1398
        %v1779 = vpop.f32.mrb[0].mxu0
        %v1780 = vadd.f32 %v1619, %v1779
        %v1781 = vpop.f32.mrb[0].mxu0
        %v1782 = vpop.f32.mrb[0].mxu0
        %v1783 = vadd.f32 %v1622, %v1782
        %v1784 = vpop.f32.mrb[0].mxu0
        %1785 = vdwg.mxu0
        %v1786 = vadd.f32 %v1048, %v1660
        %v1787 = vadd.f32 %v1049, %v1663
        %v1788 = vadd.f32 %v1050, %v1668
        %v1789 = vadd.f32 %v1051, %v1671
        %v1790 = vadd.f32 %v1052, %v1676
        %v1791 = vadd.f32 %v1053, %v1679
        %v1792 = vadd.f32 %v1054, %v1684
        %v1793 = vadd.f32 %v1055, %v1687
        %v1794 = vadd.f32 %v1056, %v1692
        %v1795 = vadd.f32 %v1057, %v1695
        %v1796 = vadd.f32 %v1058, %v1700
        %v1797 = vadd.f32 %v1059, %v1703
        %v1798 = vadd.f32 %v1060, %v1708
        %v1799 = vadd.f32 %v1061, %v1711
        %v1800 = vadd.f32 %v1062, %v1716
        %v1801 = vadd.f32 %v1063, %v1719
        %v1802 = vadd.f32 %v1064, %v1724
        %v1803 = vadd.f32 %v1065, %v1727
        %v1804 = vadd.f32 %v1066, %v1732
        %v1805 = vadd.f32 %v1067, %v1735
        %v1806 = vadd.f32 %v1068, %v1740
        %v1807 = vadd.f32 %v1069, %v1743
        %v1808 = vadd.f32 %v1070, %v1748
        %v1809 = vadd.f32 %v1071, %v1751
        %v1810 = vadd.f32 %v1072, %v1756
        %v1811 = vadd.f32 %v1073, %v1759
        %v1812 = vadd.f32 %v1074, %v1764
        %v1813 = vadd.f32 %v1075, %v1767
        %v1814 = vadd.f32 %v1076, %v1772
        %v1815 = vadd.f32 %v1077, %v1775
        %v1816 = vadd.f32 %v1078, %v1780
        %v1817 = vadd.f32 %v1079, %v1783
        %1818 = vst [vmem:[#allocation2] sm:$0xff] %v1786
        %1819 = vst [vmem:[#allocation2 + $0x8] sm:$0xff] %v1787
        %1820 = vst [vmem:[#allocation2 + $0x10] sm:$0xff] %v1788
        %1821 = vst [vmem:[#allocation2 + $0x18] sm:$0xff] %v1789
        %1822 = vst [vmem:[#allocation2 + $0x20] sm:$0xff] %v1790
        %1823 = vst [vmem:[#allocation2 + $0x28] sm:$0xff] %v1791
        %1824 = vst [vmem:[#allocation2 + $0x30] sm:$0xff] %v1792
        %1825 = vst [vmem:[#allocation2 + $0x38] sm:$0xff] %v1793
        %1826 = vst [vmem:[#allocation2 + $0x40] sm:$0xff] %v1794
        %1827 = vst [vmem:[#allocation2 + $0x48] sm:$0xff] %v1795
        %1828 = vst [vmem:[#allocation2 + $0x50] sm:$0xff] %v1796
        %1829 = vst [vmem:[#allocation2 + $0x58] sm:$0xff] %v1797
        %1830 = vst [vmem:[#allocation2 + $0x60] sm:$0xff] %v1798
        %1831 = vst [vmem:[#allocation2 + $0x68] sm:$0xff] %v1799
        %1832 = vst [vmem:[#allocation2 + $0x70] sm:$0xff] %v1800
        %1833 = vst [vmem:[#allocation2 + $0x78] sm:$0xff] %v1801
        %1834 = vst [vmem:[#allocation2 + $0x80] sm:$0xff] %v1802
        %1835 = vst [vmem:[#allocation2 + $0x88] sm:$0xff] %v1803
        %1836 = vst [vmem:[#allocation2 + $0x90] sm:$0xff] %v1804
        %1837 = vst [vmem:[#allocation2 + $0x98] sm:$0xff] %v1805
        %1838 = vst [vmem:[#allocation2 + $0xa0] sm:$0xff] %v1806
        %1839 = vst [vmem:[#allocation2 + $0xa8] sm:$0xff] %v1807
        %1840 = vst [vmem:[#allocation2 + $0xb0] sm:$0xff] %v1808
        %1841 = vst [vmem:[#allocation2 + $0xb8] sm:$0xff] %v1809
        %1842 = vst [vmem:[#allocation2 + $0xc0] sm:$0xff] %v1810
        %1843 = vst [vmem:[#allocation2 + $0xc8] sm:$0xff] %v1811
        %1844 = vst [vmem:[#allocation2 + $0xd0] sm:$0xff] %v1812
        %1845 = vst [vmem:[#allocation2 + $0xd8] sm:$0xff] %v1813
        %1846 = vst [vmem:[#allocation2 + $0xe0] sm:$0xff] %v1814
        %1847 = vst [vmem:[#allocation2 + $0xe8] sm:$0xff] %v1815
        %1848 = vst [vmem:[#allocation2 + $0xf0] sm:$0xff] %v1816
        %1849 = vst [vmem:[#allocation2 + $0xf8] sm:$0xff] %v1817
        // Predicated region
        $region61: #{tpu_custom_call.1} parent=43 // pred_check
          %p1850 = pneg %p371
        $region62: #{tpu_custom_call.1} parent=43 // pred_check_branch
          %1852 = sbr.rel (%p1850) target = $region64
        $region63: #{tpu_custom_call.1} parent=43 // pred_region
          %v1853 = vld [vmem:[#allocation2] sm:$0xff]
          %v1854 = vld [vmem:[#allocation2 + $0x8] sm:$0xff]
          %v1855 = vld [vmem:[#allocation2 + $0x10] sm:$0xff]
          %v1856 = vld [vmem:[#allocation2 + $0x18] sm:$0xff]
          %v1857 = vld [vmem:[#allocation2 + $0x20] sm:$0xff]
          %v1858 = vld [vmem:[#allocation2 + $0x28] sm:$0xff]
          %v1859 = vld [vmem:[#allocation2 + $0x30] sm:$0xff]
          %v1860 = vld [vmem:[#allocation2 + $0x38] sm:$0xff]
          %v1861 = vld [vmem:[#allocation2 + $0x40] sm:$0xff]
          %v1862 = vld [vmem:[#allocation2 + $0x48] sm:$0xff]
          %v1863 = vld [vmem:[#allocation2 + $0x50] sm:$0xff]
          %v1864 = vld [vmem:[#allocation2 + $0x58] sm:$0xff]
          %v1865 = vld [vmem:[#allocation2 + $0x60] sm:$0xff]
          %v1866 = vld [vmem:[#allocation2 + $0x68] sm:$0xff]
          %v1867 = vld [vmem:[#allocation2 + $0x70] sm:$0xff]
          %v1868 = vld [vmem:[#allocation2 + $0x78] sm:$0xff]
          %v1869 = vld [vmem:[#allocation2 + $0x80] sm:$0xff]
          %v1870 = vld [vmem:[#allocation2 + $0x88] sm:$0xff]
          %v1871 = vld [vmem:[#allocation2 + $0x90] sm:$0xff]
          %v1872 = vld [vmem:[#allocation2 + $0x98] sm:$0xff]
          %v1873 = vld [vmem:[#allocation2 + $0xa0] sm:$0xff]
          %v1874 = vld [vmem:[#allocation2 + $0xa8] sm:$0xff]
          %v1875 = vld [vmem:[#allocation2 + $0xb0] sm:$0xff]
          %v1876 = vld [vmem:[#allocation2 + $0xb8] sm:$0xff]
          %v1877 = vld [vmem:[#allocation2 + $0xc0] sm:$0xff]
          %v1878 = vld [vmem:[#allocation2 + $0xc8] sm:$0xff]
          %v1879 = vld [vmem:[#allocation2 + $0xd0] sm:$0xff]
          %v1880 = vld [vmem:[#allocation2 + $0xd8] sm:$0xff]
          %v1881 = vld [vmem:[#allocation2 + $0xe0] sm:$0xff]
          %v1882 = vld [vmem:[#allocation2 + $0xe8] sm:$0xff]
          %v1883 = vld [vmem:[#allocation2 + $0xf0] sm:$0xff]
          %v1884 = vld [vmem:[#allocation2 + $0xf8] sm:$0xff]
          %v1885 = vld [vmem:[%s3] sm:$0x1]
          %v1887 = vlaneseq
          %v1888 = vshrl.u32 %v1887, 7
          %v1889 = vsub.s32 0, %v1888
          %v1890 = vrot.slane %v1885, %v1889
          %v1892 = vadd.f32 %v1853, %v1890
          %v1893 = vadd.f32 %v1854, %v1890
          %v1894 = vadd.f32 %v1855, %v1890
          %v1895 = vadd.f32 %v1856, %v1890
          %v1896 = vadd.f32 %v1857, %v1890
          %v1897 = vadd.f32 %v1858, %v1890
          %v1898 = vadd.f32 %v1859, %v1890
          %v1899 = vadd.f32 %v1860, %v1890
          %v1900 = vadd.f32 %v1861, %v1890
          %v1901 = vadd.f32 %v1862, %v1890
          %v1902 = vadd.f32 %v1863, %v1890
          %v1903 = vadd.f32 %v1864, %v1890
          %v1904 = vadd.f32 %v1865, %v1890
          %v1905 = vadd.f32 %v1866, %v1890
          %v1906 = vadd.f32 %v1867, %v1890
          %v1907 = vadd.f32 %v1868, %v1890
          %v1908 = vadd.f32 %v1869, %v1890
          %v1909 = vadd.f32 %v1870, %v1890
          %v1910 = vadd.f32 %v1871, %v1890
          %v1911 = vadd.f32 %v1872, %v1890
          %v1912 = vadd.f32 %v1873, %v1890
          %v1913 = vadd.f32 %v1874, %v1890
          %v1914 = vadd.f32 %v1875, %v1890
          %v1915 = vadd.f32 %v1876, %v1890
          %v1916 = vadd.f32 %v1877, %v1890
          %v1917 = vadd.f32 %v1878, %v1890
          %v1918 = vadd.f32 %v1879, %v1890
          %v1919 = vadd.f32 %v1880, %v1890
          %v1920 = vadd.f32 %v1881, %v1890
          %v1921 = vadd.f32 %v1882, %v1890
          %v1922 = vadd.f32 %v1883, %v1890
          %v1923 = vadd.f32 %v1884, %v1890
          %1924 = vst [vmem:[%s359] sm:$0xff] %v1892
          %1925 = vst [vmem:[%s359 + $0x8] sm:$0xff] %v1893
          %1926 = vst [vmem:[%s359 + $0x10] sm:$0xff] %v1894
          %1927 = vst [vmem:[%s359 + $0x18] sm:$0xff] %v1895
          %1928 = vst [vmem:[%s359 + $0x20] sm:$0xff] %v1896
          %1929 = vst [vmem:[%s359 + $0x28] sm:$0xff] %v1897
          %1930 = vst [vmem:[%s359 + $0x30] sm:$0xff] %v1898
          %1931 = vst [vmem:[%s359 + $0x38] sm:$0xff] %v1899
          %1932 = vst [vmem:[%s359 + $0x40] sm:$0xff] %v1900
          %1933 = vst [vmem:[%s359 + $0x48] sm:$0xff] %v1901
          %1934 = vst [vmem:[%s359 + $0x50] sm:$0xff] %v1902
          %1935 = vst [vmem:[%s359 + $0x58] sm:$0xff] %v1903
          %1936 = vst [vmem:[%s359 + $0x60] sm:$0xff] %v1904
          %1937 = vst [vmem:[%s359 + $0x68] sm:$0xff] %v1905
          %1938 = vst [vmem:[%s359 + $0x70] sm:$0xff] %v1906
          %1939 = vst [vmem:[%s359 + $0x78] sm:$0xff] %v1907
          %1940 = vst [vmem:[%s359 + $0x80] sm:$0xff] %v1908
          %1941 = vst [vmem:[%s359 + $0x88] sm:$0xff] %v1909
          %1942 = vst [vmem:[%s359 + $0x90] sm:$0xff] %v1910
          %1943 = vst [vmem:[%s359 + $0x98] sm:$0xff] %v1911
          %1944 = vst [vmem:[%s359 + $0xa0] sm:$0xff] %v1912
          %1945 = vst [vmem:[%s359 + $0xa8] sm:$0xff] %v1913
          %1946 = vst [vmem:[%s359 + $0xb0] sm:$0xff] %v1914
          %1947 = vst [vmem:[%s359 + $0xb8] sm:$0xff] %v1915
          %1948 = vst [vmem:[%s359 + $0xc0] sm:$0xff] %v1916
          %1949 = vst [vmem:[%s359 + $0xc8] sm:$0xff] %v1917
          %1950 = vst [vmem:[%s359 + $0xd0] sm:$0xff] %v1918
          %1951 = vst [vmem:[%s359 + $0xd8] sm:$0xff] %v1919
          %1952 = vst [vmem:[%s359 + $0xe0] sm:$0xff] %v1920
          %1953 = vst [vmem:[%s359 + $0xe8] sm:$0xff] %v1921
          %1954 = vst [vmem:[%s359 + $0xf0] sm:$0xff] %v1922
          %1955 = vst [vmem:[%s359 + $0xf8] sm:$0xff] %v1923
          %v1956 = vld [vmem:[%s4] sm:$0x1]
          %v1958 = vlaneseq
          %v1959 = vshrl.u32 %v1958, 7
          %v1960 = vsub.s32 0, %v1959
          %v1961 = vrot.slane %v1956, %v1960
          %v1963 = vmul.f32 %v1892, %v1961
          %v1964 = vmul.f32 %v1893, %v1961
          %v1965 = vmul.f32 %v1894, %v1961
          %v1966 = vmul.f32 %v1895, %v1961
          %v1967 = vmul.f32 %v1896, %v1961
          %v1968 = vmul.f32 %v1897, %v1961
          %v1969 = vmul.f32 %v1898, %v1961
          %v1970 = vmul.f32 %v1899, %v1961
          %v1971 = vmul.f32 %v1900, %v1961
          %v1972 = vmul.f32 %v1901, %v1961
          %v1973 = vmul.f32 %v1902, %v1961
          %v1974 = vmul.f32 %v1903, %v1961
          %v1975 = vmul.f32 %v1904, %v1961
          %v1976 = vmul.f32 %v1905, %v1961
          %v1977 = vmul.f32 %v1906, %v1961
          %v1978 = vmul.f32 %v1907, %v1961
          %v1979 = vmul.f32 %v1908, %v1961
          %v1980 = vmul.f32 %v1909, %v1961
          %v1981 = vmul.f32 %v1910, %v1961
          %v1982 = vmul.f32 %v1911, %v1961
          %v1983 = vmul.f32 %v1912, %v1961
          %v1984 = vmul.f32 %v1913, %v1961
          %v1985 = vmul.f32 %v1914, %v1961
          %v1986 = vmul.f32 %v1915, %v1961
          %v1987 = vmul.f32 %v1916, %v1961
          %v1988 = vmul.f32 %v1917, %v1961
          %v1989 = vmul.f32 %v1918, %v1961
          %v1990 = vmul.f32 %v1919, %v1961
          %v1991 = vmul.f32 %v1920, %v1961
          %v1992 = vmul.f32 %v1921, %v1961
          %v1993 = vmul.f32 %v1922, %v1961
          %v1994 = vmul.f32 %v1923, %v1961
          %1995 = vadd.xlane.f32.xlu0 %v1963
          %v1996 = vpop.xlane.xlu0 %1995
          %1997 = vadd.xlane.f32.xlu0 %v1964
          %v1998 = vpop.xlane.xlu0 %1997
          %1999 = vadd.xlane.f32.xlu0 %v1965
          %v2000 = vpop.xlane.xlu0 %1999
          %2001 = vadd.xlane.f32.xlu0 %v1966
          %v2002 = vpop.xlane.xlu0 %2001
          %2003 = vadd.xlane.f32.xlu0 %v1967
          %v2004 = vpop.xlane.xlu0 %2003
          %2005 = vadd.xlane.f32.xlu0 %v1968
          %v2006 = vpop.xlane.xlu0 %2005
          %2007 = vadd.xlane.f32.xlu0 %v1969
          %v2008 = vpop.xlane.xlu0 %2007
          %2009 = vadd.xlane.f32.xlu0 %v1970
          %v2010 = vpop.xlane.xlu0 %2009
          %2011 = vadd.xlane.f32.xlu0 %v1971
          %v2012 = vpop.xlane.xlu0 %2011
          %2013 = vadd.xlane.f32.xlu0 %v1972
          %v2014 = vpop.xlane.xlu0 %2013
          %2015 = vadd.xlane.f32.xlu0 %v1973
          %v2016 = vpop.xlane.xlu0 %2015
          %2017 = vadd.xlane.f32.xlu0 %v1974
          %v2018 = vpop.xlane.xlu0 %2017
          %2019 = vadd.xlane.f32.xlu0 %v1975
          %v2020 = vpop.xlane.xlu0 %2019
          %2021 = vadd.xlane.f32.xlu0 %v1976
          %v2022 = vpop.xlane.xlu0 %2021
          %2023 = vadd.xlane.f32.xlu0 %v1977
          %v2024 = vpop.xlane.xlu0 %2023
          %2025 = vadd.xlane.f32.xlu0 %v1978
          %v2026 = vpop.xlane.xlu0 %2025
          %2027 = vadd.xlane.f32.xlu0 %v1979
          %v2028 = vpop.xlane.xlu0 %2027
          %2029 = vadd.xlane.f32.xlu0 %v1980
          %v2030 = vpop.xlane.xlu0 %2029
          %2031 = vadd.xlane.f32.xlu0 %v1981
          %v2032 = vpop.xlane.xlu0 %2031
          %2033 = vadd.xlane.f32.xlu0 %v1982
          %v2034 = vpop.xlane.xlu0 %2033
          %2035 = vadd.xlane.f32.xlu0 %v1983
          %v2036 = vpop.xlane.xlu0 %2035
          %2037 = vadd.xlane.f32.xlu0 %v1984
          %v2038 = vpop.xlane.xlu0 %2037
          %2039 = vadd.xlane.f32.xlu0 %v1985
          %v2040 = vpop.xlane.xlu0 %2039
          %2041 = vadd.xlane.f32.xlu0 %v1986
          %v2042 = vpop.xlane.xlu0 %2041
          %2043 = vadd.xlane.f32.xlu0 %v1987
          %v2044 = vpop.xlane.xlu0 %2043
          %2045 = vadd.xlane.f32.xlu0 %v1988
          %v2046 = vpop.xlane.xlu0 %2045
          %2047 = vadd.xlane.f32.xlu0 %v1989
          %v2048 = vpop.xlane.xlu0 %2047
          %2049 = vadd.xlane.f32.xlu0 %v1990
          %v2050 = vpop.xlane.xlu0 %2049
          %2051 = vadd.xlane.f32.xlu0 %v1991
          %v2052 = vpop.xlane.xlu0 %2051
          %2053 = vadd.xlane.f32.xlu0 %v1992
          %v2054 = vpop.xlane.xlu0 %2053
          %2055 = vadd.xlane.f32.xlu0 %v1993
          %v2056 = vpop.xlane.xlu0 %2055
          %2057 = vadd.xlane.f32.xlu0 %v1994
          %v2058 = vpop.xlane.xlu0 %2057
          %s2059 = sld [smem:[#allocation3]]
          %v2060 = vstv %s2059
          %v2061 = vadd.f32 %v1996, %v2060
          %v2062 = vadd.f32 %v1998, %v2060
          %v2063 = vadd.f32 %v2000, %v2060
          %v2064 = vadd.f32 %v2002, %v2060
          %v2065 = vadd.f32 %v2004, %v2060
          %v2066 = vadd.f32 %v2006, %v2060
          %v2067 = vadd.f32 %v2008, %v2060
          %v2068 = vadd.f32 %v2010, %v2060
          %v2069 = vadd.f32 %v2012, %v2060
          %v2070 = vadd.f32 %v2014, %v2060
          %v2071 = vadd.f32 %v2016, %v2060
          %v2072 = vadd.f32 %v2018, %v2060
          %v2073 = vadd.f32 %v2020, %v2060
          %v2074 = vadd.f32 %v2022, %v2060
          %v2075 = vadd.f32 %v2024, %v2060
          %v2076 = vadd.f32 %v2026, %v2060
          %v2077 = vadd.f32 %v2028, %v2060
          %v2078 = vadd.f32 %v2030, %v2060
          %v2079 = vadd.f32 %v2032, %v2060
          %v2080 = vadd.f32 %v2034, %v2060
          %v2081 = vadd.f32 %v2036, %v2060
          %v2082 = vadd.f32 %v2038, %v2060
          %v2083 = vadd.f32 %v2040, %v2060
          %v2084 = vadd.f32 %v2042, %v2060
          %v2085 = vadd.f32 %v2044, %v2060
          %v2086 = vadd.f32 %v2046, %v2060
          %v2087 = vadd.f32 %v2048, %v2060
          %v2088 = vadd.f32 %v2050, %v2060
          %v2089 = vadd.f32 %v2052, %v2060
          %v2090 = vadd.f32 %v2054, %v2060
          %v2091 = vadd.f32 %v2056, %v2060
          %v2092 = vadd.f32 %v2058, %v2060
          %vm2093 = vcmask 7168
          %2094 = vst.msk [vmem:[%s367] sm:$0xff] %vm2093, %v2061
          %2095 = vst.msk [vmem:[%s367 + $0x8] sm:$0xff] %vm2093, %v2062
          %2096 = vst.msk [vmem:[%s367 + $0x10] sm:$0xff] %vm2093, %v2063
          %2097 = vst.msk [vmem:[%s367 + $0x18] sm:$0xff] %vm2093, %v2064
          %2098 = vst.msk [vmem:[%s367 + $0x20] sm:$0xff] %vm2093, %v2065
          %2099 = vst.msk [vmem:[%s367 + $0x28] sm:$0xff] %vm2093, %v2066
          %2100 = vst.msk [vmem:[%s367 + $0x30] sm:$0xff] %vm2093, %v2067
          %2101 = vst.msk [vmem:[%s367 + $0x38] sm:$0xff] %vm2093, %v2068
          %2102 = vst.msk [vmem:[%s367 + $0x40] sm:$0xff] %vm2093, %v2069
          %2103 = vst.msk [vmem:[%s367 + $0x48] sm:$0xff] %vm2093, %v2070
          %2104 = vst.msk [vmem:[%s367 + $0x50] sm:$0xff] %vm2093, %v2071
          %2105 = vst.msk [vmem:[%s367 + $0x58] sm:$0xff] %vm2093, %v2072
          %2106 = vst.msk [vmem:[%s367 + $0x60] sm:$0xff] %vm2093, %v2073
          %2107 = vst.msk [vmem:[%s367 + $0x68] sm:$0xff] %vm2093, %v2074
          %2108 = vst.msk [vmem:[%s367 + $0x70] sm:$0xff] %vm2093, %v2075
          %2109 = vst.msk [vmem:[%s367 + $0x78] sm:$0xff] %vm2093, %v2076
          %2110 = vst.msk [vmem:[%s367 + $0x80] sm:$0xff] %vm2093, %v2077
          %2111 = vst.msk [vmem:[%s367 + $0x88] sm:$0xff] %vm2093, %v2078
          %2112 = vst.msk [vmem:[%s367 + $0x90] sm:$0xff] %vm2093, %v2079
          %2113 = vst.msk [vmem:[%s367 + $0x98] sm:$0xff] %vm2093, %v2080
          %2114 = vst.msk [vmem:[%s367 + $0xa0] sm:$0xff] %vm2093, %v2081
          %2115 = vst.msk [vmem:[%s367 + $0xa8] sm:$0xff] %vm2093, %v2082
          %2116 = vst.msk [vmem:[%s367 + $0xb0] sm:$0xff] %vm2093, %v2083
          %2117 = vst.msk [vmem:[%s367 + $0xb8] sm:$0xff] %vm2093, %v2084
          %2118 = vst.msk [vmem:[%s367 + $0xc0] sm:$0xff] %vm2093, %v2085
          %2119 = vst.msk [vmem:[%s367 + $0xc8] sm:$0xff] %vm2093, %v2086
          %2120 = vst.msk [vmem:[%s367 + $0xd0] sm:$0xff] %vm2093, %v2087
          %2121 = vst.msk [vmem:[%s367 + $0xd8] sm:$0xff] %vm2093, %v2088
          %2122 = vst.msk [vmem:[%s367 + $0xe0] sm:$0xff] %vm2093, %v2089
          %2123 = vst.msk [vmem:[%s367 + $0xe8] sm:$0xff] %vm2093, %v2090
          %2124 = vst.msk [vmem:[%s367 + $0xf0] sm:$0xff] %vm2093, %v2091
          %2125 = vst.msk [vmem:[%s367 + $0xf8] sm:$0xff] %vm2093, %v2092
        $region64: #{tpu_custom_call.1} parent=43 // pred_fallthru
          _
        %s2126 = smul.u32 32, %s31
        %p2127 = scmp.lt.s32.totalorder %s2126, 63
        %s2128 = scalar_select %p2127, %s2126, 63
        %s2129 = smul.addr %s2128, 8
        %s2130 = scalar_lea.vmem %s6, %s2129
        %s2131 = sand.u32 %s211, 1
        %s2132 = scalar_lea.sflag [#allocation6], %s2131
        %s2133 = sand.u32 %s211, 1
        %s2134 = smul.addr %s2133, 256
        %s2135 = scalar_lea.vmem [#allocation10], %s2134
        // Predicated region
        $region65: #{tpu_custom_call.1} parent=43 // pred_check
          %p2136 = pneg %p195
        $region66: #{tpu_custom_call.1} parent=43 // pred_check_branch
          %2138 = sbr.rel (%p2136) target = $region68
        $region67: #{tpu_custom_call.1} parent=43 // pred_region
          %s2139 = smul.u32 32, %s31
        $region68: #{tpu_custom_call.1} parent=43 // pred_fallthru
          _
        // Predicated region
        $region69: #{tpu_custom_call.1} parent=43 // pred_check
          %p2140 = pneg %p221
        $region70: #{tpu_custom_call.1} parent=43 // pred_check_branch
          %2142 = sbr.rel (%p2140) target = $region72
        $region71: #{tpu_custom_call.1} parent=43 // pred_region
          %s2143 = smul.u32 32, %s31
          %s2145 = ssub.s32 4096, 4096
          %2146 = vsyncadd %s2132, %s2145
          %s2147 = smul.addr %s2143, 128
          %s2148 = scalar_lea.hbm %s7, %s2147
          %s2149 = sshll.u32 %s2135, 4
          %s2150 = int_to_ptr.vmem [resolvable:$true] %s2149
          %2155 = dma.vmem_to_hbm [thread:$0]  %s2150, 4096, %s2148, %s2132, 128, 128, 8
        $region72: #{tpu_custom_call.1} parent=43 // pred_fallthru
          _
      $region44: #{tpu_custom_call.1} parent=5 // pred_fallthru
        _
      %p2156 = scmp.le.s32.totalorder 2, %s22
      // Predicated region
      $region73: #{tpu_custom_call.1} parent=5 // pred_check
        %p2157 = pneg %p2156
      $region74: #{tpu_custom_call.1} parent=5 // pred_check_branch
        %2159 = sbr.rel (%p2157) target = $region76
      $region75: #{tpu_custom_call.1} parent=5 // pred_region
        %s2160 = ssub.s32 %s22, 2
        // Predicated region
        $region77: #{tpu_custom_call.1} parent=75 // pred_check
          %p2161 = pneg %p201
        $region78: #{tpu_custom_call.1} parent=75 // pred_check_branch
          %2163 = sbr.rel (%p2161) target = $region80
        $region79: #{tpu_custom_call.1} parent=75 // pred_region
          %s2164 = smul.u32 32, %s33
          %p2165 = scmp.lt.s32.totalorder %s2164, 63
          %s2166 = scalar_select %p2165, %s2164, 63
          %s2167 = smul.addr %s2166, 8
          %s2168 = scalar_lea.vmem %s6, %s2167
        $region80: #{tpu_custom_call.1} parent=75 // pred_fallthru
          _
        // Predicated region
        $region81: #{tpu_custom_call.1} parent=75 // pred_check
          %p2169 = pneg %p227
        $region82: #{tpu_custom_call.1} parent=75 // pred_check_branch
          %2171 = sbr.rel (%p2169) target = $region84
        $region83: #{tpu_custom_call.1} parent=75 // pred_region
          %s2172 = sand.u32 %s212, 1
          %s2173 = scalar_lea.sflag [#allocation6], %s2172
          %s2174 = sand.u32 %s212, 1
          %s2175 = smul.addr %s2174, 256
          %s2176 = scalar_lea.vmem [#allocation10], %s2175
          %2177 = dma.done %s2173, 4096
        $region84: #{tpu_custom_call.1} parent=75 // pred_fallthru
          _
      $region76: #{tpu_custom_call.1} parent=5 // pred_fallthru
        _
    $region6: #{tpu_custom_call.1} parent=1 // loop_footer
      %s26 = sadd.s32 1, %s22
    $region7: #{tpu_custom_call.1} parent=1 // loop_footer_branch
      %21 = sbr.rel target = $region3
    $region8: #{tpu_custom_call.1} parent=1 // loop_exit
      _
    %2178 = vsyncpa [#allocation5], 1
    %s2179 = scalar_lea.sflag [#allocation5], 1
    %2180 = vsyncpa %s2179, 1
    %2181 = vsyncpa [#allocation8], 1
    %2182 = vsyncpa [#allocation6], 1
    %s2183 = scalar_lea.sflag [#allocation6], 1
    %2184 = vsyncpa %s2183, 1

</llo_original>
